<compile_context>
chip_gen: v7x
topology: tpu7x:2x2x1
jax: 0.10.0
libtpu: 0.0.40
codegen_flags: <defaults>
</compile_context>

<pallas_src>
import functools

import jax
import jax.numpy as jnp
from jax import lax
from jax.experimental import pallas as pl
from jax.experimental.pallas import tpu as pltpu


def _round_up(x, m):
    return (x + m - 1) // m * m


# ----------------------------------------------------------------------------
# Pallas kernel 1 (per layer): XWc = colscale * (X @ W)   (bf16 out)
#   colscale_j = dinv_j * prev_scale_j  (0 for dropped / padded nodes)
# ----------------------------------------------------------------------------
def _xw_kernel(x_ref, w_ref, cs_ref, o_ref):
    xw = jnp.dot(x_ref[...], w_ref[...], preferred_element_type=jnp.float32)
    o_ref[...] = (xw * cs_ref[...]).astype(o_ref.dtype)


def xw_scaled(x_bf, w_bf, cs, *, tile):
    npad, f = x_bf.shape
    hdim = w_bf.shape[1]
    grid = (npad // tile,)
    return pl.pallas_call(
        _xw_kernel,
        out_shape=jax.ShapeDtypeStruct((npad, hdim), jnp.bfloat16),
        grid_spec=pltpu.PrefetchScalarGridSpec(
            num_scalar_prefetch=0,
            grid=grid,
            in_specs=[
                pl.BlockSpec((tile, f), lambda r: (r, 0)),      # X tile (bf16)
                pl.BlockSpec((f, hdim), lambda r: (0, 0)),      # W (bf16, resident, small)
                pl.BlockSpec((tile, 1), lambda r: (r, 0)),      # colscale tile
            ],
            out_specs=pl.BlockSpec((tile, hdim), lambda r: (r, 0)),
        ),
        compiler_params=pltpu.CompilerParams(dimension_semantics=("parallel",)),
    )(x_bf, w_bf, cs)


# ----------------------------------------------------------------------------
# Pallas kernel 2 (per layer): h = relu( dinv_i * (sum_j A_ij XWc_j + XWc_i) + b )
#   (implicit normalized adjacency: column norm / keep-mask / prev tanh-scale are
#    already folded into XWc; row norm + self-loop applied here)
# ----------------------------------------------------------------------------
def _gcn_aggregate_kernel(a_ref, xwk_ref, xwi_ref, dinv_ref, b_ref, h_ref, acc_ref):
    k = pl.program_id(1)
    nk = pl.num_programs(1)

    @pl.when(k == 0)
    def _init():
        acc_ref[...] = jnp.zeros_like(acc_ref)

    # A (bf16) @ XWc (bf16) -> f32 accumulate on the MXU
    acc_ref[...] += jnp.dot(a_ref[...], xwk_ref[...],
                            preferred_element_type=jnp.float32)

    @pl.when(k == nk - 1)
    def _finalize():
        d_r = dinv_ref[...]                                        # [TM, 1] f32
        # self-loop term: dinv_i * XWc_i == dinv_i^2 * prev_scale_i * (XW)_i
        agg = d_r * (acc_ref[...] + xwi_ref[...].astype(jnp.float32))
        h = jnp.maximum(agg + b_ref[...], 0.0)
        h = jnp.where(d_r > 0.0, h, 0.0)                           # zero dropped/padded rows
        h_ref[...] = h.astype(h_ref.dtype)                         # bf16 store


def gcn_aggregate(a_bf, xwc, dinv, bias, *, tile):
    npad = a_bf.shape[0]
    hdim = xwc.shape[1]
    grid = (npad // tile, npad // tile)
    return pl.pallas_call(
        _gcn_aggregate_kernel,
        out_shape=jax.ShapeDtypeStruct((npad, hdim), jnp.bfloat16),
        grid_spec=pltpu.PrefetchScalarGridSpec(
            num_scalar_prefetch=0,
            grid=grid,
            in_specs=[
                pl.BlockSpec((tile, tile), lambda i, k: (i, k)),   # A tile (bf16)
                pl.BlockSpec((tile, hdim), lambda i, k: (k, 0)),   # XWc source-node block
                pl.BlockSpec((tile, hdim), lambda i, k: (i, 0)),   # XWc self-loop block
                pl.BlockSpec((tile, 1), lambda i, k: (i, 0)),      # dinv row tile
                pl.BlockSpec((1, hdim), lambda i, k: (0, 0)),      # bias
            ],
            out_specs=pl.BlockSpec((tile, hdim), lambda i, k: (i, 0)),
            scratch_shapes=[pltpu.VMEM((tile, hdim), jnp.float32)],
        ),
        compiler_params=pltpu.CompilerParams(
            dimension_semantics=("parallel", "arbitrary"),
            vmem_limit_bytes=32 * 1024 * 1024),
    )(a_bf, xwc, xwc, dinv, bias)


# ----------------------------------------------------------------------------
# Pallas kernel 3: graph readout = concat([global_max_pool, global_mean_pool], 1)
# Tiled over node blocks; per-graph running max / sum held in VMEM scratch.
# ----------------------------------------------------------------------------
def _readout_kernel(h_ref, scale_ref, gid_ref, cnt_ref, o_ref, max_acc, sum_acc):
    r = pl.program_id(0)
    nr = pl.num_programs(0)
    neg = jnp.float32(-3.0e38)
    bp = max_acc.shape[0]

    @pl.when(r == 0)
    def _init():
        max_acc[...] = jnp.full_like(max_acc, neg)
        sum_acc[...] = jnp.zeros_like(sum_acc)

    hp = h_ref[...].astype(jnp.float32) * scale_ref[...]            # pooled features [TR, H]
    gid = gid_ref[...]                                              # [TR, 1] int32 (-1 = dropped)
    graph_ids = lax.broadcasted_iota(jnp.int32, (1, bp), 1)         # [1, BP]
    onehot = (gid == graph_ids).astype(jnp.float32)                 # [TR, BP]

    # mean numerator: one MXU contraction over the node axis per tile
    sum_acc[...] += lax.dot_general(
        onehot, hp, dimension_numbers=(((0,), (0,)), ((), ())),
        preferred_element_type=jnp.float32)                         # [BP, H]

    # running per-graph max (BP tiny -> static unroll over lane slices)
    rows = []
    for g in range(bp):
        m = onehot[:, g:g + 1]                                      # [TR, 1]
        rows.append(jnp.max(jnp.where(m > 0.0, hp, neg), axis=0, keepdims=True))
    max_acc[...] = jnp.maximum(max_acc[...], jnp.concatenate(rows, axis=0))

    @pl.when(r == nr - 1)
    def _finalize():
        cnt = cnt_ref[...]                                          # [BP, 1]
        gmean = sum_acc[...] / jnp.maximum(cnt, 1.0)
        gmax = jnp.where(cnt > 0.0, max_acc[...], 0.0)
        o_ref[...] = jnp.concatenate([gmax, gmean], axis=1)         # single lane-dense store


def readout(h, scale, gid, cnt, *, tile):
    npad, hdim = h.shape
    bpad = cnt.shape[0]
    grid = (npad // tile,)
    return pl.pallas_call(
        _readout_kernel,
        out_shape=jax.ShapeDtypeStruct((bpad, 2 * hdim), jnp.float32),
        grid_spec=pltpu.PrefetchScalarGridSpec(
            num_scalar_prefetch=0,
            grid=grid,
            in_specs=[
                pl.BlockSpec((tile, hdim), lambda r: (r, 0)),       # h tile (bf16)
                pl.BlockSpec((tile, 1), lambda r: (r, 0)),          # tanh(score)*keep
                pl.BlockSpec((tile, 1), lambda r: (r, 0)),          # graph id (kept) / -1
                pl.BlockSpec((bpad, 1), lambda r: (0, 0)),          # kept-node count per graph
            ],
            out_specs=pl.BlockSpec((bpad, 2 * hdim), lambda r: (0, 0)),
            scratch_shapes=[pltpu.VMEM((bpad, hdim), jnp.float32),
                            pltpu.VMEM((bpad, hdim), jnp.float32)],
        ),
        compiler_params=pltpu.CompilerParams(dimension_semantics=("arbitrary",)),
    )(h, scale, gid, cnt)


# ----------------------------------------------------------------------------
# XLA glue: TopKPooling selection via per-graph sort-based rank (no O(N^2) masks)
# ----------------------------------------------------------------------------
def topk_keep(score, keep_prev, batch, ratio, num_graph_slots):
    """PyG TopKPooling: keep top ceil(ratio * n_g) nodes per graph by score."""
    n = score.shape[0]
    neg = jnp.float32(-3.0e38)
    eff = jnp.where(keep_prev > 0.0, score, neg)
    # sort: primary graph id, secondary score descending, ties by original index
    order = jnp.lexsort((jnp.arange(n), -eff, batch))
    node_counts = jnp.zeros((num_graph_slots,), jnp.int32).at[batch].add(1)
    starts = jnp.concatenate([jnp.zeros((1,), jnp.int32),
                              jnp.cumsum(node_counts)[:-1]])
    rank_sorted = jnp.arange(n, dtype=jnp.int32) - starts[batch[order]]
    rank = jnp.zeros((n,), jnp.int32).at[order].set(rank_sorted)
    counts_prev = jnp.zeros((num_graph_slots,), jnp.float32).at[batch].add(keep_prev)
    k = jnp.ceil(ratio * counts_prev)
    keep = (keep_prev > 0.0) & (rank.astype(jnp.float32) < k[batch])
    return keep.astype(jnp.float32)


# ----------------------------------------------------------------------------
# GCNPoolBlockLayer forward
# ----------------------------------------------------------------------------
def gcn_pool_block_forward(params, x, a, batch, num_graphs, pooling_ratio, *, max_tile=512):
    n, f_in = x.shape
    hidden = params[0][0].shape[1]

    tile = min(max_tile, _round_up(n, 128))
    npad = _round_up(n, tile)
    bpad = _round_up(num_graphs, 8)
    fpad = _round_up(f_in, 128)
    hpad = _round_up(hidden, 128)

    # zero-pad to static TPU-friendly shapes; padded nodes / graphs carry keep == 0.
    # adjacency and features are stored bf16 (0/1 adjacency is exact in bf16).
    x_p = jnp.zeros((npad, fpad), jnp.bfloat16).at[:n, :f_in].set(x.astype(jnp.bfloat16))
    a_p = jnp.zeros((npad, npad), jnp.bfloat16).at[:n, :n].set(a.astype(jnp.bfloat16))
    batch_p = jnp.zeros((npad,), jnp.int32).at[:n].set(batch)
    keep = jnp.zeros((npad,), jnp.float32).at[:n].set(1.0)
    prev_scale = keep                                     # layer-0 features are unscaled

    out = jnp.zeros((bpad, 2 * hpad), jnp.float32)
    feats = x_p
    for (w, b, p) in params:
        f_cur = feats.shape[1]
        w_p = jnp.zeros((f_cur, hpad), jnp.bfloat16).at[:w.shape[0], :w.shape[1]].set(
            w.astype(jnp.bfloat16))
        b_p = jnp.zeros((1, hpad), jnp.float32).at[0, :b.shape[0]].set(b)
        pn_p = jnp.zeros((hpad,), jnp.float32).at[:p.shape[0]].set(p / jnp.linalg.norm(p))

        # degree / symmetric norm of the CURRENT masked graph (bf16 A, f32 accumulate):
        # deg = K (A K 1) + K 1 ; dinv == 0 for dropped / padded nodes.
        nbr = jnp.dot(a_p, keep.astype(jnp.bfloat16), preferred_element_type=jnp.float32)
        deg = keep * nbr + keep
        dinv = jnp.where(deg > 0.0, lax.rsqrt(deg), 0.0)

        # hoisted X@W with column scaling folded in (Pallas pass, bf16 out)
        xwc = xw_scaled(feats, w_p, (dinv * prev_scale)[:, None], tile=tile)
        # main aggregation kernel (bf16 h out)
        h = gcn_aggregate(a_p, xwc, dinv[:, None], b_p, tile=tile)

        # TopKPooling score (tiny matvec, kept outside the kernel -> no masked stores)
        score = jnp.tanh(jnp.dot(h.astype(jnp.float32), pn_p))
        keep = topk_keep(score, keep, batch_p, pooling_ratio, bpad)
        prev_scale = score * keep                         # tanh(score) scaling on kept nodes

        gid = jnp.where(keep > 0.0, batch_p, -1)[:, None].astype(jnp.int32)
        cnt = jnp.zeros((bpad,), jnp.float32).at[batch_p].add(keep)[:, None]
        out = out + readout(h, prev_scale[:, None], gid, cnt, tile=tile)

        feats = h

    # un-pad: [B, 2*hidden] = cat([global_max_pool, global_mean_pool], dim=1)
    return jnp.concatenate([out[:num_graphs, :hidden],
                            out[:num_graphs, hpad:hpad + hidden]], axis=1)


def init_params(key, input_size, layer_num, hidden_size):
    params = []
    in_dim = input_size
    for _ in range(layer_num):
        key, kw, kb, kp = jax.random.split(key, 4)
        w = 0.2 * jax.random.normal(kw, (in_dim, hidden_size), jnp.float32)   # GCNConv weight
        b = 0.05 * jax.random.normal(kb, (hidden_size,), jnp.float32)         # GCNConv bias
        p = jax.random.normal(kp, (hidden_size,), jnp.float32)                # TopKPooling proj
        params.append((w, b, p))
        in_dim = hidden_size
    return params


if __name__ == "__main__":
    key = jax.random.PRNGKey(0)
    num_graphs, nodes_per_graph = 2, 8
    n = num_graphs * nodes_per_graph
    input_size, hidden_size, layer_num, pooling_ratio = 4, 32, 3, 0.5

    kx, kparams = jax.random.split(key)
    x = jax.random.normal(kx, (n, input_size), jnp.float32)
    batch = jnp.repeat(jnp.arange(num_graphs, dtype=jnp.int32), nodes_per_graph)

    # dense symmetric adjacency: ring within each graph plus one chord
    a = jnp.zeros((n, n), jnp.float32)
    for g in range(num_graphs):
        off = g * nodes_per_graph
        for i in range(nodes_per_graph):
            j = (i + 1) % nodes_per_graph
            a = a.at[off + i, off + j].set(1.0)
            a = a.at[off + j, off + i].set(1.0)
        a = a.at[off + 0, off + 4].set(1.0)
        a = a.at[off + 4, off + 0].set(1.0)

    params = init_params(kparams, input_size, layer_num, hidden_size)

    fwd = jax.jit(functools.partial(gcn_pool_block_forward,
                                    num_graphs=num_graphs,
                                    pooling_ratio=pooling_ratio))
    out = fwd(params, x, a, batch)
    jax.block_until_ready(out)
    assert out.shape == (num_graphs, 2 * hidden_size)
    print("KERNEL_OK")
</pallas_src>

<mosaic_0001>
module attributes {stable_mosaic.version = 11 : i64} {
  func.func private @main(%arg0: i32) attributes {dimension_semantics = [#tpu.dimension_semantics<core_parallel>], iteration_bounds = array<i64: 2>, tpu.core_type = #tpu.core_type<sc_scalar_subcore>, window_params = []} {
    return
  }
}

module attributes {stable_mosaic.version = 11 : i64} {
  func.func private @main(%arg0: i32) attributes {dimension_semantics = [#tpu.dimension_semantics<core_parallel>], iteration_bounds = array<i64: 2>, tpu.core_type = #tpu.core_type<sc_scalar_subcore>, window_params = []} {
    return
  }
}

module attributes {stable_mosaic.version = 11 : i64} {
  func.func @_gcn_aggregate_kernel(%arg0: i32, %arg1: i32, %arg2: memref<128x128xbf16, #tpu.memory_space<vmem>>, %arg3: memref<128x128xbf16, #tpu.memory_space<vmem>>, %arg4: memref<128x128xbf16, #tpu.memory_space<vmem>>, %arg5: memref<128x1xf32, #tpu.memory_space<vmem>>, %arg6: memref<1x128xf32, #tpu.memory_space<vmem>>, %arg7: memref<128x128xbf16, #tpu.memory_space<vmem>>, %arg8: memref<128x128xf32, #tpu.memory_space<vmem>>) attributes {dimension_semantics = [#tpu.dimension_semantics<parallel>, #tpu.dimension_semantics<arbitrary>], iteration_bounds = array<i64: 1, 1>, scalar_prefetch = 0 : i64, scratch_operands = 1 : i64, tpu.core_type = #tpu.core_type<tc>, window_params = [{transform_indices = @transform_0, window_bounds = array<i64: 128, 128>}, {transform_indices = @transform_1, window_bounds = array<i64: 128, 128>}, {transform_indices = @transform_2, window_bounds = array<i64: 128, 128>}, {transform_indices = @transform_3, window_bounds = array<i64: 128, 1>}, {pipeline_mode = #tpu.pipeline_mode<synchronous>, transform_indices = @transform_4, window_bounds = array<i64: 1, 128>}, {transform_indices = @transform_5, window_bounds = array<i64: 128, 128>}]} {
    %c0_i32 = arith.constant 0 : i32
    %0 = arith.cmpi eq, %arg1, %c0_i32 : i32
    %1 = arith.extui %0 : i1 to i32
    %c0_i32_0 = arith.constant 0 : i32
    %2 = arith.cmpi ne, %1, %c0_i32_0 : i32
    scf.if %2 {
      %cst_10 = arith.constant 0.000000e+00 : f32
      %12 = vector.broadcast %cst_10 : f32 to vector<128x128xf32>
      %c0_11 = arith.constant 0 : index
      %c0_12 = arith.constant 0 : index
      %13 = vector.load %arg8[%c0_11, %c0_12] : memref<128x128xf32, #tpu.memory_space<vmem>>, vector<128x128xf32>
      tpu.vector_store %arg8[%c0_11, %c0_12], %12 {strides = array<i32>} : memref<128x128xf32, #tpu.memory_space<vmem>>, vector<128x128xf32>,
    } else {
    }
    %c0 = arith.constant 0 : index
    %c0_1 = arith.constant 0 : index
    %3 = vector.load %arg8[%c0, %c0_1] : memref<128x128xf32, #tpu.memory_space<vmem>>, vector<128x128xf32>
    %c0_2 = arith.constant 0 : index
    %c0_3 = arith.constant 0 : index
    %4 = vector.load %arg2[%c0_2, %c0_3] : memref<128x128xbf16, #tpu.memory_space<vmem>>, vector<128x128xbf16>
    %c0_4 = arith.constant 0 : index
    %c0_5 = arith.constant 0 : index
    %5 = vector.load %arg3[%c0_4, %c0_5] : memref<128x128xbf16, #tpu.memory_space<vmem>>, vector<128x128xbf16>
    %cst = arith.constant dense<0.000000e+00> : vector<128x128xf32>
    %6 = tpu.matmul %4, %5, %cst {dimension_numbers = #tpu.dot_dimension_numbers<[1], [0], [0], [1], [0, 0, 1, 1], [], []>} : vector<128x128xbf16>, vector<128x128xbf16>, vector<128x128xf32> -> vector<128x128xf32>
    %7 = arith.addf %3, %6 : vector<128x128xf32>
    %c0_6 = arith.constant 0 : index
    %c0_7 = arith.constant 0 : index
    %8 = vector.load %arg8[%c0_6, %c0_7] : memref<128x128xf32, #tpu.memory_space<vmem>>, vector<128x128xf32>
    tpu.vector_store %arg8[%c0_6, %c0_7], %7 {strides = array<i32>} : memref<128x128xf32, #tpu.memory_space<vmem>>, vector<128x128xf32>,
    %c0_i32_8 = arith.constant 0 : i32
    %9 = arith.cmpi eq, %arg1, %c0_i32_8 : i32
    %10 = arith.extui %9 : i1 to i32
    %c0_i32_9 = arith.constant 0 : i32
    %11 = arith.cmpi ne, %10, %c0_i32_9 : i32
    scf.if %11 {
      %c0_10 = arith.constant 0 : index
      %c0_11 = arith.constant 0 : index
      %12 = vector.load %arg5[%c0_10, %c0_11] : memref<128x1xf32, #tpu.memory_space<vmem>>, vector<128x1xf32>
      %c0_12 = arith.constant 0 : index
      %c0_13 = arith.constant 0 : index
      %13 = vector.load %arg8[%c0_12, %c0_13] : memref<128x128xf32, #tpu.memory_space<vmem>>, vector<128x128xf32>
      %c0_14 = arith.constant 0 : index
      %c0_15 = arith.constant 0 : index
      %14 = vector.load %arg4[%c0_14, %c0_15] : memref<128x128xbf16, #tpu.memory_space<vmem>>, vector<128x128xbf16>
      %15 = arith.extf %14 : vector<128x128xbf16> to vector<128x128xf32>
      %16 = arith.addf %13, %15 : vector<128x128xf32>
      %17 = vector.broadcast %12 : vector<128x1xf32> to vector<128x128xf32>
      %18 = arith.mulf %17, %16 : vector<128x128xf32>
      %c0_16 = arith.constant 0 : index
      %c0_17 = arith.constant 0 : index
      %19 = vector.load %arg6[%c0_16, %c0_17] : memref<1x128xf32, #tpu.memory_space<vmem>>, vector<1x128xf32>
      %20 = vector.broadcast %19 : vector<1x128xf32> to vector<128x128xf32>
      %21 = arith.addf %18, %20 : vector<128x128xf32>
      %cst_18 = arith.constant 0.000000e+00 : f32
      %22 = vector.broadcast %cst_18 : f32 to vector<128x128xf32>
      %23 = arith.maximumf %21, %22 : vector<128x128xf32>
      %cst_19 = arith.constant 0.000000e+00 : f32
      %24 = vector.broadcast %cst_19 : f32 to vector<128x1xf32>
      %25 = arith.cmpf ogt, %12, %24 : vector<128x1xf32>
      %cst_20 = arith.constant 0.000000e+00 : f32
      %26 = vector.shape_cast %25 : vector<128x1xi1> to vector<128x1xi1>
      %27 = vector.broadcast %26 : vector<128x1xi1> to vector<128x128xi1>
      %28 = vector.broadcast %cst_20 : f32 to vector<128x128xf32>
      %29 = arith.select %27, %23, %28 : vector<128x128xi1>, vector<128x128xf32>
      %30 = arith.truncf %29 : vector<128x128xf32> to vector<128x128xbf16>
      %c0_21 = arith.constant 0 : index
      %c0_22 = arith.constant 0 : index
      %31 = vector.load %arg7[%c0_21, %c0_22] : memref<128x128xbf16, #tpu.memory_space<vmem>>, vector<128x128xbf16>
      tpu.vector_store %arg7[%c0_21, %c0_22], %30 {strides = array<i32>} : memref<128x128xbf16, #tpu.memory_space<vmem>>, vector<128x128xbf16>,
    } else {
    }
    return
  }
  func.func @transform_0(%arg0: i32, %arg1: i32) -> (i32, i32) {
    %c0_i32 = arith.constant 0 : i32
    return %arg0, %arg1 : i32, i32
  }
  func.func @transform_1(%arg0: i32, %arg1: i32) -> (i32, i32) {
    %c0_i32 = arith.constant 0 : i32
    %c0_i32_0 = arith.constant 0 : i32
    return %arg1, %c0_i32 : i32, i32
  }
  func.func @transform_2(%arg0: i32, %arg1: i32) -> (i32, i32) {
    %c0_i32 = arith.constant 0 : i32
    %c0_i32_0 = arith.constant 0 : i32
    return %arg0, %c0_i32 : i32, i32
  }
  func.func @transform_3(%arg0: i32, %arg1: i32) -> (i32, i32) {
    %c0_i32 = arith.constant 0 : i32
    %c0_i32_0 = arith.constant 0 : i32
    return %arg0, %c0_i32 : i32, i32
  }
  func.func @transform_4(%arg0: i32, %arg1: i32) -> (i32, i32) {
    %c0_i32 = arith.constant 0 : i32
    %c0_i32_0 = arith.constant 0 : i32
    %c0_i32_1 = arith.constant 0 : i32
    return %c0_i32, %c0_i32_0 : i32, i32
  }
  func.func @transform_5(%arg0: i32, %arg1: i32) -> (i32, i32) {
    %c0_i32 = arith.constant 0 : i32
    %c0_i32_0 = arith.constant 0 : i32
    return %arg0, %c0_i32 : i32, i32
  }
}

module attributes {stable_mosaic.version = 11 : i64} {
  func.func @_xw_kernel(%arg0: i32, %arg1: memref<128x128xbf16, #tpu.memory_space<vmem>>, %arg2: memref<128x128xbf16, #tpu.memory_space<vmem>>, %arg3: memref<128x1xf32, #tpu.memory_space<vmem>>, %arg4: memref<128x128xbf16, #tpu.memory_space<vmem>>) attributes {dimension_semantics = [#tpu.dimension_semantics<parallel>], iteration_bounds = array<i64: 1>, scalar_prefetch = 0 : i64, scratch_operands = 0 : i64, tpu.core_type = #tpu.core_type<tc>, window_params = [{transform_indices = @transform_0, window_bounds = array<i64: 128, 128>}, {pipeline_mode = #tpu.pipeline_mode<synchronous>, transform_indices = @transform_1, window_bounds = array<i64: 128, 128>}, {transform_indices = @transform_2, window_bounds = array<i64: 128, 1>}, {transform_indices = @transform_3, window_bounds = array<i64: 128, 128>}]} {
    %c0 = arith.constant 0 : index
    %c0_0 = arith.constant 0 : index
    %0 = vector.load %arg1[%c0, %c0_0] : memref<128x128xbf16, #tpu.memory_space<vmem>>, vector<128x128xbf16>
    %c0_1 = arith.constant 0 : index
    %c0_2 = arith.constant 0 : index
    %1 = vector.load %arg2[%c0_1, %c0_2] : memref<128x128xbf16, #tpu.memory_space<vmem>>, vector<128x128xbf16>
    %cst = arith.constant dense<0.000000e+00> : vector<128x128xf32>
    %2 = tpu.matmul %0, %1, %cst {dimension_numbers = #tpu.dot_dimension_numbers<[1], [0], [0], [1], [0, 0, 1, 1], [], []>} : vector<128x128xbf16>, vector<128x128xbf16>, vector<128x128xf32> -> vector<128x128xf32>
    %c0_3 = arith.constant 0 : index
    %c0_4 = arith.constant 0 : index
    %3 = vector.load %arg3[%c0_3, %c0_4] : memref<128x1xf32, #tpu.memory_space<vmem>>, vector<128x1xf32>
    %4 = vector.broadcast %3 : vector<128x1xf32> to vector<128x128xf32>
    %5 = arith.mulf %2, %4 : vector<128x128xf32>
    %6 = arith.truncf %5 : vector<128x128xf32> to vector<128x128xbf16>
    %c0_5 = arith.constant 0 : index
    %c0_6 = arith.constant 0 : index
    %7 = vector.load %arg4[%c0_5, %c0_6] : memref<128x128xbf16, #tpu.memory_space<vmem>>, vector<128x128xbf16>
    tpu.vector_store %arg4[%c0_5, %c0_6], %6 {strides = array<i32>} : memref<128x128xbf16, #tpu.memory_space<vmem>>, vector<128x128xbf16>,
    return
  }
  func.func @transform_0(%arg0: i32) -> (i32, i32) {
    %c0_i32 = arith.constant 0 : i32
    %c0_i32_0 = arith.constant 0 : i32
    return %arg0, %c0_i32 : i32, i32
  }
  func.func @transform_1(%arg0: i32) -> (i32, i32) {
    %c0_i32 = arith.constant 0 : i32
    %c0_i32_0 = arith.constant 0 : i32
    %c0_i32_1 = arith.constant 0 : i32
    return %c0_i32, %c0_i32_0 : i32, i32
  }
  func.func @transform_2(%arg0: i32) -> (i32, i32) {
    %c0_i32 = arith.constant 0 : i32
    %c0_i32_0 = arith.constant 0 : i32
    return %arg0, %c0_i32 : i32, i32
  }
  func.func @transform_3(%arg0: i32) -> (i32, i32) {
    %c0_i32 = arith.constant 0 : i32
    %c0_i32_0 = arith.constant 0 : i32
    return %arg0, %c0_i32 : i32, i32
  }
}

module attributes {stable_mosaic.version = 11 : i64} {
  func.func @_readout_kernel(%arg0: i32, %arg1: memref<128x128xbf16, #tpu.memory_space<vmem>>, %arg2: memref<128x1xf32, #tpu.memory_space<vmem>>, %arg3: memref<128x1xi32, #tpu.memory_space<vmem>>, %arg4: memref<8x1xf32, #tpu.memory_space<vmem>>, %arg5: memref<8x256xf32, #tpu.memory_space<vmem>>, %arg6: memref<8x128xf32, #tpu.memory_space<vmem>>, %arg7: memref<8x128xf32, #tpu.memory_space<vmem>>) attributes {dimension_semantics = [#tpu.dimension_semantics<arbitrary>], iteration_bounds = array<i64: 1>, scalar_prefetch = 0 : i64, scratch_operands = 2 : i64, tpu.core_type = #tpu.core_type<tc>, window_params = [{transform_indices = @transform_0, window_bounds = array<i64: 128, 128>}, {transform_indices = @transform_1, window_bounds = array<i64: 128, 1>}, {transform_indices = @transform_2, window_bounds = array<i64: 128, 1>}, {pipeline_mode = #tpu.pipeline_mode<synchronous>, transform_indices = @transform_3, window_bounds = array<i64: 8, 1>}, {pipeline_mode = #tpu.pipeline_mode<synchronous>, transform_indices = @transform_4, window_bounds = array<i64: 8, 256>}]} {
    %c0_i32 = arith.constant 0 : i32
    %0 = arith.cmpi eq, %arg0, %c0_i32 : i32
    %1 = arith.extui %0 : i1 to i32
    %cst = arith.constant -3.000000e+38 : f32
    %c0_i32_0 = arith.constant 0 : i32
    %2 = arith.cmpi ne, %1, %c0_i32_0 : i32
    scf.if %2 {
      %98 = vector.broadcast %cst : f32 to vector<8x128xf32>
      %c0_41 = arith.constant 0 : index
      %c0_42 = arith.constant 0 : index
      %99 = vector.load %arg6[%c0_41, %c0_42] : memref<8x128xf32, #tpu.memory_space<vmem>>, vector<8x128xf32>
      tpu.vector_store %arg6[%c0_41, %c0_42], %98 {strides = array<i32>} : memref<8x128xf32, #tpu.memory_space<vmem>>, vector<8x128xf32>,
      %cst_43 = arith.constant 0.000000e+00 : f32
      %100 = vector.broadcast %cst_43 : f32 to vector<8x128xf32>
      %c0_44 = arith.constant 0 : index
      %c0_45 = arith.constant 0 : index
      %101 = vector.load %arg7[%c0_44, %c0_45] : memref<8x128xf32, #tpu.memory_space<vmem>>, vector<8x128xf32>
      tpu.vector_store %arg7[%c0_44, %c0_45], %100 {strides = array<i32>} : memref<8x128xf32, #tpu.memory_space<vmem>>, vector<8x128xf32>,
    } else {
    }
    %c0 = arith.constant 0 : index
    %c0_1 = arith.constant 0 : index
    %3 = vector.load %arg1[%c0, %c0_1] : memref<128x128xbf16, #tpu.memory_space<vmem>>, vector<128x128xbf16>
    %4 = arith.extf %3 : vector<128x128xbf16> to vector<128x128xf32>
    %c0_2 = arith.constant 0 : index
    %c0_3 = arith.constant 0 : index
    %5 = vector.load %arg2[%c0_2, %c0_3] : memref<128x1xf32, #tpu.memory_space<vmem>>, vector<128x1xf32>
    %6 = vector.broadcast %5 : vector<128x1xf32> to vector<128x128xf32>
    %7 = arith.mulf %4, %6 : vector<128x128xf32>
    %c0_4 = arith.constant 0 : index
    %c0_5 = arith.constant 0 : index
    %8 = vector.load %arg3[%c0_4, %c0_5] : memref<128x1xi32, #tpu.memory_space<vmem>>, vector<128x1xi32>
    %9 = tpu.iota {dimensions = array<i32: 1>} : vector<1x8xi32>
    %10 = vector.broadcast %8 : vector<128x1xi32> to vector<128x8xi32>
    %11 = vector.broadcast %9 : vector<1x8xi32> to vector<128x8xi32>
    %12 = arith.cmpi eq, %10, %11 : vector<128x8xi32>
    %13 = arith.extui %12 : vector<128x8xi1> to vector<128x8xi32>
    %14 = arith.sitofp %13 : vector<128x8xi32> to vector<128x8xf32>
    %c0_6 = arith.constant 0 : index
    %c0_7 = arith.constant 0 : index
    %15 = vector.load %arg7[%c0_6, %c0_7] : memref<8x128xf32, #tpu.memory_space<vmem>>, vector<8x128xf32>
    %cst_8 = arith.constant dense<0.000000e+00> : vector<8x128xf32>
    %16 = tpu.matmul %14, %7, %cst_8 {dimension_numbers = #tpu.dot_dimension_numbers<[0], [0], [1], [1], [0, 1, 1, 1], [], []>} : vector<128x8xf32>, vector<128x128xf32>, vector<8x128xf32> -> vector<8x128xf32>
    %17 = arith.addf %15, %16 : vector<8x128xf32>
    %c0_9 = arith.constant 0 : index
    %c0_10 = arith.constant 0 : index
    %18 = vector.load %arg7[%c0_9, %c0_10] : memref<8x128xf32, #tpu.memory_space<vmem>>, vector<8x128xf32>
    tpu.vector_store %arg7[%c0_9, %c0_10], %17 {strides = array<i32>} : memref<8x128xf32, #tpu.memory_space<vmem>>, vector<8x128xf32>,
    %19 = vector.extract_strided_slice %14 {offsets = [0, 0], sizes = [128, 1], strides = [1, 1]} : vector<128x8xf32> to vector<128x1xf32>
    %cst_11 = arith.constant 0.000000e+00 : f32
    %20 = vector.broadcast %cst_11 : f32 to vector<128x1xf32>
    %21 = arith.cmpf ogt, %19, %20 : vector<128x1xf32>
    %cst_12 = arith.constant -3.000000e+38 : f32
    %22 = vector.shape_cast %21 : vector<128x1xi1> to vector<128x1xi1>
    %23 = vector.broadcast %22 : vector<128x1xi1> to vector<128x128xi1>
    %24 = vector.broadcast %cst_12 : f32 to vector<128x128xf32>
    %25 = arith.select %23, %7, %24 : vector<128x128xi1>, vector<128x128xf32>
    %cst_13 = arith.constant dense<0xFF800000> : vector<128xf32>
    %26 = vector.multi_reduction <maximumf>, %25, %cst_13 [0] : vector<128x128xf32> to vector<128xf32>
    %27 = vector.shape_cast %26 : vector<128xf32> to vector<1x128xf32>
    %28 = vector.extract_strided_slice %14 {offsets = [0, 1], sizes = [128, 1], strides = [1, 1]} : vector<128x8xf32> to vector<128x1xf32>
    %cst_14 = arith.constant 0.000000e+00 : f32
    %29 = vector.broadcast %cst_14 : f32 to vector<128x1xf32>
    %30 = arith.cmpf ogt, %28, %29 : vector<128x1xf32>
    %cst_15 = arith.constant -3.000000e+38 : f32
    %31 = vector.shape_cast %30 : vector<128x1xi1> to vector<128x1xi1>
    %32 = vector.broadcast %31 : vector<128x1xi1> to vector<128x128xi1>
    %33 = vector.broadcast %cst_15 : f32 to vector<128x128xf32>
    %34 = arith.select %32, %7, %33 : vector<128x128xi1>, vector<128x128xf32>
    %cst_16 = arith.constant dense<0xFF800000> : vector<128xf32>
    %35 = vector.multi_reduction <maximumf>, %34, %cst_16 [0] : vector<128x128xf32> to vector<128xf32>
    %36 = vector.shape_cast %35 : vector<128xf32> to vector<1x128xf32>
    %37 = vector.extract_strided_slice %14 {offsets = [0, 2], sizes = [128, 1], strides = [1, 1]} : vector<128x8xf32> to vector<128x1xf32>
    %cst_17 = arith.constant 0.000000e+00 : f32
    %38 = vector.broadcast %cst_17 : f32 to vector<128x1xf32>
    %39 = arith.cmpf ogt, %37, %38 : vector<128x1xf32>
    %cst_18 = arith.constant -3.000000e+38 : f32
    %40 = vector.shape_cast %39 : vector<128x1xi1> to vector<128x1xi1>
    %41 = vector.broadcast %40 : vector<128x1xi1> to vector<128x128xi1>
    %42 = vector.broadcast %cst_18 : f32 to vector<128x128xf32>
    %43 = arith.select %41, %7, %42 : vector<128x128xi1>, vector<128x128xf32>
    %cst_19 = arith.constant dense<0xFF800000> : vector<128xf32>
    %44 = vector.multi_reduction <maximumf>, %43, %cst_19 [0] : vector<128x128xf32> to vector<128xf32>
    %45 = vector.shape_cast %44 : vector<128xf32> to vector<1x128xf32>
    %46 = vector.extract_strided_slice %14 {offsets = [0, 3], sizes = [128, 1], strides = [1, 1]} : vector<128x8xf32> to vector<128x1xf32>
    %cst_20 = arith.constant 0.000000e+00 : f32
    %47 = vector.broadcast %cst_20 : f32 to vector<128x1xf32>
    %48 = arith.cmpf ogt, %46, %47 : vector<128x1xf32>
    %cst_21 = arith.constant -3.000000e+38 : f32
    %49 = vector.shape_cast %48 : vector<128x1xi1> to vector<128x1xi1>
    %50 = vector.broadcast %49 : vector<128x1xi1> to vector<128x128xi1>
    %51 = vector.broadcast %cst_21 : f32 to vector<128x128xf32>
    %52 = arith.select %50, %7, %51 : vector<128x128xi1>, vector<128x128xf32>
    %cst_22 = arith.constant dense<0xFF800000> : vector<128xf32>
    %53 = vector.multi_reduction <maximumf>, %52, %cst_22 [0] : vector<128x128xf32> to vector<128xf32>
    %54 = vector.shape_cast %53 : vector<128xf32> to vector<1x128xf32>
    %55 = vector.extract_strided_slice %14 {offsets = [0, 4], sizes = [128, 1], strides = [1, 1]} : vector<128x8xf32> to vector<128x1xf32>
    %cst_23 = arith.constant 0.000000e+00 : f32
    %56 = vector.broadcast %cst_23 : f32 to vector<128x1xf32>
    %57 = arith.cmpf ogt, %55, %56 : vector<128x1xf32>
    %cst_24 = arith.constant -3.000000e+38 : f32
    %58 = vector.shape_cast %57 : vector<128x1xi1> to vector<128x1xi1>
    %59 = vector.broadcast %58 : vector<128x1xi1> to vector<128x128xi1>
    %60 = vector.broadcast %cst_24 : f32 to vector<128x128xf32>
    %61 = arith.select %59, %7, %60 : vector<128x128xi1>, vector<128x128xf32>
    %cst_25 = arith.constant dense<0xFF800000> : vector<128xf32>
    %62 = vector.multi_reduction <maximumf>, %61, %cst_25 [0] : vector<128x128xf32> to vector<128xf32>
    %63 = vector.shape_cast %62 : vector<128xf32> to vector<1x128xf32>
    %64 = vector.extract_strided_slice %14 {offsets = [0, 5], sizes = [128, 1], strides = [1, 1]} : vector<128x8xf32> to vector<128x1xf32>
    %cst_26 = arith.constant 0.000000e+00 : f32
    %65 = vector.broadcast %cst_26 : f32 to vector<128x1xf32>
    %66 = arith.cmpf ogt, %64, %65 : vector<128x1xf32>
    %cst_27 = arith.constant -3.000000e+38 : f32
    %67 = vector.shape_cast %66 : vector<128x1xi1> to vector<128x1xi1>
    %68 = vector.broadcast %67 : vector<128x1xi1> to vector<128x128xi1>
    %69 = vector.broadcast %cst_27 : f32 to vector<128x128xf32>
    %70 = arith.select %68, %7, %69 : vector<128x128xi1>, vector<128x128xf32>
    %cst_28 = arith.constant dense<0xFF800000> : vector<128xf32>
    %71 = vector.multi_reduction <maximumf>, %70, %cst_28 [0] : vector<128x128xf32> to vector<128xf32>
    %72 = vector.shape_cast %71 : vector<128xf32> to vector<1x128xf32>
    %73 = vector.extract_strided_slice %14 {offsets = [0, 6], sizes = [128, 1], strides = [1, 1]} : vector<128x8xf32> to vector<128x1xf32>
    %cst_29 = arith.constant 0.000000e+00 : f32
    %74 = vector.broadcast %cst_29 : f32 to vector<128x1xf32>
    %75 = arith.cmpf ogt, %73, %74 : vector<128x1xf32>
    %cst_30 = arith.constant -3.000000e+38 : f32
    %76 = vector.shape_cast %75 : vector<128x1xi1> to vector<128x1xi1>
    %77 = vector.broadcast %76 : vector<128x1xi1> to vector<128x128xi1>
    %78 = vector.broadcast %cst_30 : f32 to vector<128x128xf32>
    %79 = arith.select %77, %7, %78 : vector<128x128xi1>, vector<128x128xf32>
    %cst_31 = arith.constant dense<0xFF800000> : vector<128xf32>
    %80 = vector.multi_reduction <maximumf>, %79, %cst_31 [0] : vector<128x128xf32> to vector<128xf32>
    %81 = vector.shape_cast %80 : vector<128xf32> to vector<1x128xf32>
    %82 = vector.extract_strided_slice %14 {offsets = [0, 7], sizes = [128, 1], strides = [1, 1]} : vector<128x8xf32> to vector<128x1xf32>
    %cst_32 = arith.constant 0.000000e+00 : f32
    %83 = vector.broadcast %cst_32 : f32 to vector<128x1xf32>
    %84 = arith.cmpf ogt, %82, %83 : vector<128x1xf32>
    %cst_33 = arith.constant -3.000000e+38 : f32
    %85 = vector.shape_cast %84 : vector<128x1xi1> to vector<128x1xi1>
    %86 = vector.broadcast %85 : vector<128x1xi1> to vector<128x128xi1>
    %87 = vector.broadcast %cst_33 : f32 to vector<128x128xf32>
    %88 = arith.select %86, %7, %87 : vector<128x128xi1>, vector<128x128xf32>
    %cst_34 = arith.constant dense<0xFF800000> : vector<128xf32>
    %89 = vector.multi_reduction <maximumf>, %88, %cst_34 [0] : vector<128x128xf32> to vector<128xf32>
    %90 = vector.shape_cast %89 : vector<128xf32> to vector<1x128xf32>
    %c0_35 = arith.constant 0 : index
    %c0_36 = arith.constant 0 : index
    %91 = vector.load %arg6[%c0_35, %c0_36] : memref<8x128xf32, #tpu.memory_space<vmem>>, vector<8x128xf32>
    %92 = tpu.concatenate %27, %36, %45, %54, %63, %72, %81, %90 in 0 : vector<1x128xf32>, vector<1x128xf32>, vector<1x128xf32>, vector<1x128xf32>, vector<1x128xf32>, vector<1x128xf32>, vector<1x128xf32>, vector<1x128xf32> -> vector<8x128xf32>
    %93 = arith.maximumf %91, %92 : vector<8x128xf32>
    %c0_37 = arith.constant 0 : index
    %c0_38 = arith.constant 0 : index
    %94 = vector.load %arg6[%c0_37, %c0_38] : memref<8x128xf32, #tpu.memory_space<vmem>>, vector<8x128xf32>
    tpu.vector_store %arg6[%c0_37, %c0_38], %93 {strides = array<i32>} : memref<8x128xf32, #tpu.memory_space<vmem>>, vector<8x128xf32>,
    %c0_i32_39 = arith.constant 0 : i32
    %95 = arith.cmpi eq, %arg0, %c0_i32_39 : i32
    %96 = arith.extui %95 : i1 to i32
    %c0_i32_40 = arith.constant 0 : i32
    %97 = arith.cmpi ne, %96, %c0_i32_40 : i32
    scf.if %97 {
      %c0_41 = arith.constant 0 : index
      %c0_42 = arith.constant 0 : index
      %98 = vector.load %arg4[%c0_41, %c0_42] : memref<8x1xf32, #tpu.memory_space<vmem>>, vector<8x1xf32>
      %c0_43 = arith.constant 0 : index
      %c0_44 = arith.constant 0 : index
      %99 = vector.load %arg7[%c0_43, %c0_44] : memref<8x128xf32, #tpu.memory_space<vmem>>, vector<8x128xf32>
      %cst_45 = arith.constant 1.000000e+00 : f32
      %100 = vector.broadcast %cst_45 : f32 to vector<8x1xf32>
      %101 = arith.maximumf %98, %100 : vector<8x1xf32>
      %102 = vector.broadcast %101 : vector<8x1xf32> to vector<8x128xf32>
      %103 = arith.divf %99, %102 : vector<8x128xf32>
      %cst_46 = arith.constant 0.000000e+00 : f32
      %104 = vector.broadcast %cst_46 : f32 to vector<8x1xf32>
      %105 = arith.cmpf ogt, %98, %104 : vector<8x1xf32>
      %c0_47 = arith.constant 0 : index
      %c0_48 = arith.constant 0 : index
      %106 = vector.load %arg6[%c0_47, %c0_48] : memref<8x128xf32, #tpu.memory_space<vmem>>, vector<8x128xf32>
      %cst_49 = arith.constant 0.000000e+00 : f32
      %107 = vector.shape_cast %105 : vector<8x1xi1> to vector<8x1xi1>
      %108 = vector.broadcast %107 : vector<8x1xi1> to vector<8x128xi1>
      %109 = vector.broadcast %cst_49 : f32 to vector<8x128xf32>
      %110 = arith.select %108, %106, %109 : vector<8x128xi1>, vector<8x128xf32>
      %111 = tpu.concatenate %110, %103 in 1 : vector<8x128xf32>, vector<8x128xf32> -> vector<8x256xf32>
      %c0_50 = arith.constant 0 : index
      %c0_51 = arith.constant 0 : index
      %112 = vector.load %arg5[%c0_50, %c0_51] : memref<8x256xf32, #tpu.memory_space<vmem>>, vector<8x256xf32>
      tpu.vector_store %arg5[%c0_50, %c0_51], %111 {strides = array<i32>} : memref<8x256xf32, #tpu.memory_space<vmem>>, vector<8x256xf32>,
    } else {
    }
    return
  }
  func.func @transform_0(%arg0: i32) -> (i32, i32) {
    %c0_i32 = arith.constant 0 : i32
    %c0_i32_0 = arith.constant 0 : i32
    return %arg0, %c0_i32 : i32, i32
  }
  func.func @transform_1(%arg0: i32) -> (i32, i32) {
    %c0_i32 = arith.constant 0 : i32
    %c0_i32_0 = arith.constant 0 : i32
    return %arg0, %c0_i32 : i32, i32
  }
  func.func @transform_2(%arg0: i32) -> (i32, i32) {
    %c0_i32 = arith.constant 0 : i32
    %c0_i32_0 = arith.constant 0 : i32
    return %arg0, %c0_i32 : i32, i32
  }
  func.func @transform_3(%arg0: i32) -> (i32, i32) {
    %c0_i32 = arith.constant 0 : i32
    %c0_i32_0 = arith.constant 0 : i32
    %c0_i32_1 = arith.constant 0 : i32
    return %c0_i32, %c0_i32_0 : i32, i32
  }
  func.func @transform_4(%arg0: i32) -> (i32, i32) {
    %c0_i32 = arith.constant 0 : i32
    %c0_i32_0 = arith.constant 0 : i32
    %c0_i32_1 = arith.constant 0 : i32
    return %c0_i32, %c0_i32_0 : i32, i32
  }
}

</mosaic_0001>

<llo_original>
// kernel: mul.14
$region0: #{mul.14}
  #allocation0 [shape = 's32[1]{0}', space=sflag, size = 0x4, scoped, tag = 'scoped memory for mul.14']
  %s0 = inlined_call_operand.vmem [shape: f32[128], index: 0, kind: input, shape index: {}]
  %s1 = inlined_call_operand.vmem [shape: f32[128], index: 1, kind: input, shape index: {}]
  %s2 = inlined_call_operand.vmem [shape: f32[128], index: 2, kind: output, shape index: {}]
  %v3 = vld [vmem:[%s0] sm:$0x1]
  %v4 = vld [vmem:[%s1] sm:$0x1]
  %5 = xla_tuple %v3, %v4
  %6 = xla_tuple %5
  %v7 = vmul.f32 %v3, %v4
  %8 = xla_tuple %v7
  %9 = vst [vmem:[%s2] sm:$0x1] %v7

// kernel: gcn_pool_block_forward.10
$region0: #{gcn_pool_block_forward.10}
  #allocation0 [shape = 'u32[]', space=smem, size = 0x4, offset = 0x4, fixed_abs, tag = 'smem constant byte address 0x4 - core index']
  #allocation1 [shape = 'u32[144,128]{1,0:T(1,128)}', space=vmem, size = 0x12000, scoped, tag = 'internal scratch']
  #allocation2 [shape = 'f32[128,128]{1,0:T(8,128)}', space=vmem, size = 0x10000, scoped, tag = 'scratch operand']
  %s0 = inlined_call_operand.vmem [shape: bf16[128,128], index: 0, kind: input, shape index: {}]
  %s1 = inlined_call_operand.vmem [shape: bf16[128,128], index: 1, kind: input, shape index: {}, may-alias: {1,2}]
  %s2 = inlined_call_operand.vmem [shape: bf16[128,128], index: 2, kind: input, shape index: {}, may-alias: {1,2}]
  %s3 = inlined_call_operand.vmem [shape: f32[128,1], index: 3, kind: input, shape index: {}]
  %s4 = inlined_call_operand.vmem [shape: f32[1,128], index: 4, kind: input, shape index: {}]
  %s5 = inlined_call_operand.vmem [shape: bf16[128,128], index: 5, kind: output, shape index: {}]
  %s6 = sld [smem:[#allocation0]]
  $region38: #{gcn_pool_block_forward.10} parent=0
    _
  %s8 = ssub.s32 1, %s6
  %s9 = scalar_select 0, %s8, %s6
  // Predicated region
  $region2: #{gcn_pool_block_forward.10} parent=0 // pred_check
    _
  $region3: #{gcn_pool_block_forward.10} parent=0 // pred_check_branch
    %11 = sbr.rel (0) target = $region5
  $region4: #{gcn_pool_block_forward.10} parent=0 // pred_region
    _
  $region5: #{gcn_pool_block_forward.10} parent=0 // pred_fallthru
    _
  // Predicated region
  $region6: #{gcn_pool_block_forward.10} parent=0 // pred_check
    _
  $region7: #{gcn_pool_block_forward.10} parent=0 // pred_check_branch
    %13 = sbr.rel (0) target = $region9
  $region8: #{gcn_pool_block_forward.10} parent=0 // pred_region
    _
  $region9: #{gcn_pool_block_forward.10} parent=0 // pred_fallthru
    _
  // Predicated region
  $region10: #{gcn_pool_block_forward.10} parent=0 // pred_check
    _
  $region11: #{gcn_pool_block_forward.10} parent=0 // pred_check_branch
    %15 = sbr.rel (0) target = $region13
  $region12: #{gcn_pool_block_forward.10} parent=0 // pred_region
    _
  $region13: #{gcn_pool_block_forward.10} parent=0 // pred_fallthru
    _
  // Predicated region
  $region14: #{gcn_pool_block_forward.10} parent=0 // pred_check
    _
  $region15: #{gcn_pool_block_forward.10} parent=0 // pred_check_branch
    %17 = sbr.rel (0) target = $region17
  $region16: #{gcn_pool_block_forward.10} parent=0 // pred_region
    _
  $region17: #{gcn_pool_block_forward.10} parent=0 // pred_fallthru
    _
  // Predicated region
  $region18: #{gcn_pool_block_forward.10} parent=0 // pred_check
    _
  $region19: #{gcn_pool_block_forward.10} parent=0 // pred_check_branch
    %19 = sbr.rel (0) target = $region21
  $region20: #{gcn_pool_block_forward.10} parent=0 // pred_region
    _
  $region21: #{gcn_pool_block_forward.10} parent=0 // pred_fallthru
    _
  %p21 = scmp.eq.s32.totalorder 0, 0
  // Predicated region
  $region22: #{gcn_pool_block_forward.10} parent=0 // pred_check
    %p22 = pneg %p21
  $region23: #{gcn_pool_block_forward.10} parent=0 // pred_check_branch
    %24 = sbr.rel (%p22) target = $region25
  $region24: #{gcn_pool_block_forward.10} parent=0 // pred_region
    %25 = vst [vmem:[#allocation2] sm:$0xff] 0.0
    %26 = vst [vmem:[#allocation2 + $0x8] sm:$0xff] 0.0
    %27 = vst [vmem:[#allocation2 + $0x10] sm:$0xff] 0.0
    %28 = vst [vmem:[#allocation2 + $0x18] sm:$0xff] 0.0
    %29 = vst [vmem:[#allocation2 + $0x20] sm:$0xff] 0.0
    %30 = vst [vmem:[#allocation2 + $0x28] sm:$0xff] 0.0
    %31 = vst [vmem:[#allocation2 + $0x30] sm:$0xff] 0.0
    %32 = vst [vmem:[#allocation2 + $0x38] sm:$0xff] 0.0
    %33 = vst [vmem:[#allocation2 + $0x40] sm:$0xff] 0.0
    %34 = vst [vmem:[#allocation2 + $0x48] sm:$0xff] 0.0
    %35 = vst [vmem:[#allocation2 + $0x50] sm:$0xff] 0.0
    %36 = vst [vmem:[#allocation2 + $0x58] sm:$0xff] 0.0
    %37 = vst [vmem:[#allocation2 + $0x60] sm:$0xff] 0.0
    %38 = vst [vmem:[#allocation2 + $0x68] sm:$0xff] 0.0
    %39 = vst [vmem:[#allocation2 + $0x70] sm:$0xff] 0.0
    %40 = vst [vmem:[#allocation2 + $0x78] sm:$0xff] 0.0
  $region25: #{gcn_pool_block_forward.10} parent=0 // pred_fallthru
    _
  %v41 = vld [vmem:[#allocation2] sm:$0xff]
  %v42 = vld [vmem:[#allocation2 + $0x8] sm:$0xff]
  %v43 = vld [vmem:[#allocation2 + $0x10] sm:$0xff]
  %v44 = vld [vmem:[#allocation2 + $0x18] sm:$0xff]
  %v45 = vld [vmem:[#allocation2 + $0x20] sm:$0xff]
  %v46 = vld [vmem:[#allocation2 + $0x28] sm:$0xff]
  %v47 = vld [vmem:[#allocation2 + $0x30] sm:$0xff]
  %v48 = vld [vmem:[#allocation2 + $0x38] sm:$0xff]
  %v49 = vld [vmem:[#allocation2 + $0x40] sm:$0xff]
  %v50 = vld [vmem:[#allocation2 + $0x48] sm:$0xff]
  %v51 = vld [vmem:[#allocation2 + $0x50] sm:$0xff]
  %v52 = vld [vmem:[#allocation2 + $0x58] sm:$0xff]
  %v53 = vld [vmem:[#allocation2 + $0x60] sm:$0xff]
  %v54 = vld [vmem:[#allocation2 + $0x68] sm:$0xff]
  %v55 = vld [vmem:[#allocation2 + $0x70] sm:$0xff]
  %v56 = vld [vmem:[#allocation2 + $0x78] sm:$0xff]
  %v57 = vld [vmem:[%s0] sm:$0xf]
  %v58 = vld [vmem:[%s0 + $0x4] sm:$0xf]
  %v59 = vld [vmem:[%s0 + $0x8] sm:$0xf]
  %v60 = vld [vmem:[%s0 + $0xc] sm:$0xf]
  %v61 = vld [vmem:[%s0 + $0x10] sm:$0xf]
  %v62 = vld [vmem:[%s0 + $0x14] sm:$0xf]
  %v63 = vld [vmem:[%s0 + $0x18] sm:$0xf]
  %v64 = vld [vmem:[%s0 + $0x1c] sm:$0xf]
  %v65 = vld [vmem:[%s0 + $0x20] sm:$0xf]
  %v66 = vld [vmem:[%s0 + $0x24] sm:$0xf]
  %v67 = vld [vmem:[%s0 + $0x28] sm:$0xf]
  %v68 = vld [vmem:[%s0 + $0x2c] sm:$0xf]
  %v69 = vld [vmem:[%s0 + $0x30] sm:$0xf]
  %v70 = vld [vmem:[%s0 + $0x34] sm:$0xf]
  %v71 = vld [vmem:[%s0 + $0x38] sm:$0xf]
  %v72 = vld [vmem:[%s0 + $0x3c] sm:$0xf]
  %v73 = vld [vmem:[%s1] sm:$0xf]
  %v74 = vld [vmem:[%s1 + $0x4] sm:$0xf]
  %v75 = vld [vmem:[%s1 + $0x8] sm:$0xf]
  %v76 = vld [vmem:[%s1 + $0xc] sm:$0xf]
  %v77 = vld [vmem:[%s1 + $0x10] sm:$0xf]
  %v78 = vld [vmem:[%s1 + $0x14] sm:$0xf]
  %v79 = vld [vmem:[%s1 + $0x18] sm:$0xf]
  %v80 = vld [vmem:[%s1 + $0x1c] sm:$0xf]
  %v81 = vld [vmem:[%s1 + $0x20] sm:$0xf]
  %v82 = vld [vmem:[%s1 + $0x24] sm:$0xf]
  %v83 = vld [vmem:[%s1 + $0x28] sm:$0xf]
  %v84 = vld [vmem:[%s1 + $0x2c] sm:$0xf]
  %v85 = vld [vmem:[%s1 + $0x30] sm:$0xf]
  %v86 = vld [vmem:[%s1 + $0x34] sm:$0xf]
  %v87 = vld [vmem:[%s1 + $0x38] sm:$0xf]
  %v88 = vld [vmem:[%s1 + $0x3c] sm:$0xf]
  %v105 = vunpack.c.l.b16 %v57
  %v106 = vunpack.c.l.b16 %v58
  %v107 = vunpack.c.l.b16 %v59
  %v108 = vunpack.c.l.b16 %v60
  %v109 = vunpack.c.l.b16 %v61
  %v110 = vunpack.c.l.b16 %v62
  %v111 = vunpack.c.l.b16 %v63
  %v112 = vunpack.c.l.b16 %v64
  %v113 = vunpack.c.l.b16 %v65
  %v114 = vunpack.c.l.b16 %v66
  %v115 = vunpack.c.l.b16 %v67
  %v116 = vunpack.c.l.b16 %v68
  %v117 = vunpack.c.l.b16 %v69
  %v118 = vunpack.c.l.b16 %v70
  %v119 = vunpack.c.l.b16 %v71
  %v120 = vunpack.c.l.b16 %v72
  %v121 = vpack.c.b16 %v106, %v105
  %v122 = vpack.c.b16 %v108, %v107
  %v123 = vpack.c.b16 %v110, %v109
  %v124 = vpack.c.b16 %v112, %v111
  %v125 = vpack.c.b16 %v114, %v113
  %v126 = vpack.c.b16 %v116, %v115
  %v127 = vpack.c.b16 %v118, %v117
  %v128 = vpack.c.b16 %v120, %v119
  %v153 = vunpack.c.l.b16 %v73
  %v154 = vunpack.c.l.b16 %v74
  %v155 = vunpack.c.l.b16 %v75
  %v156 = vunpack.c.l.b16 %v76
  %v157 = vunpack.c.l.b16 %v77
  %v158 = vunpack.c.l.b16 %v78
  %v159 = vunpack.c.l.b16 %v79
  %v160 = vunpack.c.l.b16 %v80
  %v161 = vunpack.c.l.b16 %v81
  %v162 = vunpack.c.l.b16 %v82
  %v163 = vunpack.c.l.b16 %v83
  %v164 = vunpack.c.l.b16 %v84
  %v165 = vunpack.c.l.b16 %v85
  %v166 = vunpack.c.l.b16 %v86
  %v167 = vunpack.c.l.b16 %v87
  %v168 = vunpack.c.l.b16 %v88
  %v169 = vpack.c.b16 %v154, %v153
  %v170 = vpack.c.b16 %v156, %v155
  %v171 = vpack.c.b16 %v158, %v157
  %v172 = vpack.c.b16 %v160, %v159
  %v173 = vpack.c.b16 %v162, %v161
  %v174 = vpack.c.b16 %v164, %v163
  %v175 = vpack.c.b16 %v166, %v165
  %v176 = vpack.c.b16 %v168, %v167
  %185 = vmatprep.subr.bf16.mxu0 0
  %186 = vmatpush1.bf16.msra.mxu0 %v169
  %187 = vmatprep.subr.bf16.mxu0 0
  %188 = vmatpush1.bf16.msra.mxu0 %v170
  %189 = vmatprep.subr.bf16.mxu0 0
  %190 = vmatpush1.bf16.msra.mxu0 %v171
  %191 = vmatprep.subr.bf16.mxu0 0
  %192 = vmatpush1.bf16.msra.mxu0 %v172
  %193 = vmatprep.subr.bf16.mxu0 0
  %194 = vmatpush1.bf16.msra.mxu0 %v173
  %195 = vmatprep.subr.bf16.mxu0 0
  %196 = vmatpush1.bf16.msra.mxu0 %v174
  %197 = vmatprep.subr.bf16.mxu0 0
  %198 = vmatpush1.bf16.msra.mxu0 %v175
  %199 = vmatprep.subr.bf16.mxu0 0
  %200 = vmatpush1.bf16.msra.mxu0 %v176
  %201 = vmatprep.subr.bf16.mxu0 0
  %202 = vmatpush1.bf16.msra.mxu0 0
  %203 = vmatprep.subr.bf16.mxu0 0
  %204 = vmatpush1.bf16.msra.mxu0 0
  %205 = vmatprep.subr.bf16.mxu0 0
  %206 = vmatpush1.bf16.msra.mxu0 0
  %207 = vmatprep.subr.bf16.mxu0 0
  %208 = vmatpush1.bf16.msra.mxu0 0
  %209 = vmatprep.subr.bf16.mxu0 0
  %210 = vmatpush1.bf16.msra.mxu0 0
  %211 = vmatprep.subr.bf16.mxu0 0
  %212 = vmatpush1.bf16.msra.mxu0 0
  %213 = vmatprep.subr.bf16.mxu0 0
  %214 = vmatpush1.bf16.msra.mxu0 0
  %215 = vmatprep.subr.bf16.mxu0 0
  %216 = vmatpush1.bf16.msra.mxu0 0
  %217 = vmatprep.mubr.bf16.mxu0 0
  %218 = vmatmul.mubr.bf16.gmra.mrb[0].mxu0 %v121
  %v219 = vpop.f32.mrb[0].mxu0
  %v220 = vadd.f32 0.0, %v219
  %v221 = vpop.f32.mrb[0].mxu0
  %v222 = vpop.f32.mrb[0].mxu0
  %v223 = vadd.f32 0.0, %v222
  %v224 = vpop.f32.mrb[0].mxu0
  %225 = vmatprep.mubr.bf16.mxu0 0
  %226 = vmatmul.mubr.bf16.gmra.mrb[0].mxu0 %v122
  %v227 = vpop.f32.mrb[0].mxu0
  %v228 = vadd.f32 0.0, %v227
  %v229 = vpop.f32.mrb[0].mxu0
  %v230 = vpop.f32.mrb[0].mxu0
  %v231 = vadd.f32 0.0, %v230
  %v232 = vpop.f32.mrb[0].mxu0
  %233 = vmatprep.mubr.bf16.mxu0 0
  %234 = vmatmul.mubr.bf16.gmra.mrb[0].mxu0 %v123
  %v235 = vpop.f32.mrb[0].mxu0
  %v236 = vadd.f32 0.0, %v235
  %v237 = vpop.f32.mrb[0].mxu0
  %v238 = vpop.f32.mrb[0].mxu0
  %v239 = vadd.f32 0.0, %v238
  %v240 = vpop.f32.mrb[0].mxu0
  %241 = vmatprep.mubr.bf16.mxu0 0
  %242 = vmatmul.mubr.bf16.gmra.mrb[0].mxu0 %v124
  %v243 = vpop.f32.mrb[0].mxu0
  %v244 = vadd.f32 0.0, %v243
  %v245 = vpop.f32.mrb[0].mxu0
  %v246 = vpop.f32.mrb[0].mxu0
  %v247 = vadd.f32 0.0, %v246
  %v248 = vpop.f32.mrb[0].mxu0
  %249 = vmatprep.mubr.bf16.mxu0 0
  %250 = vmatmul.mubr.bf16.gmra.mrb[0].mxu0 %v125
  %v251 = vpop.f32.mrb[0].mxu0
  %v252 = vadd.f32 0.0, %v251
  %v253 = vpop.f32.mrb[0].mxu0
  %v254 = vpop.f32.mrb[0].mxu0
  %v255 = vadd.f32 0.0, %v254
  %v256 = vpop.f32.mrb[0].mxu0
  %257 = vmatprep.mubr.bf16.mxu0 0
  %258 = vmatmul.mubr.bf16.gmra.mrb[0].mxu0 %v126
  %v259 = vpop.f32.mrb[0].mxu0
  %v260 = vadd.f32 0.0, %v259
  %v261 = vpop.f32.mrb[0].mxu0
  %v262 = vpop.f32.mrb[0].mxu0
  %v263 = vadd.f32 0.0, %v262
  %v264 = vpop.f32.mrb[0].mxu0
  %265 = vmatprep.mubr.bf16.mxu0 0
  %266 = vmatmul.mubr.bf16.gmra.mrb[0].mxu0 %v127
  %v267 = vpop.f32.mrb[0].mxu0
  %v268 = vadd.f32 0.0, %v267
  %v269 = vpop.f32.mrb[0].mxu0
  %v270 = vpop.f32.mrb[0].mxu0
  %v271 = vadd.f32 0.0, %v270
  %v272 = vpop.f32.mrb[0].mxu0
  %273 = vmatprep.mubr.bf16.mxu0 0
  %274 = vmatmul.mubr.bf16.gmra.mrb[0].mxu0 %v128
  %v275 = vpop.f32.mrb[0].mxu0
  %v276 = vadd.f32 0.0, %v275
  %v277 = vpop.f32.mrb[0].mxu0
  %v278 = vpop.f32.mrb[0].mxu0
  %v279 = vadd.f32 0.0, %v278
  %v280 = vpop.f32.mrb[0].mxu0
  %281 = vdwg.mxu0
  %v282 = vadd.f32 %v41, %v220
  %v283 = vadd.f32 %v42, %v223
  %v284 = vadd.f32 %v43, %v228
  %v285 = vadd.f32 %v44, %v231
  %v286 = vadd.f32 %v45, %v236
  %v287 = vadd.f32 %v46, %v239
  %v288 = vadd.f32 %v47, %v244
  %v289 = vadd.f32 %v48, %v247
  %v290 = vadd.f32 %v49, %v252
  %v291 = vadd.f32 %v50, %v255
  %v292 = vadd.f32 %v51, %v260
  %v293 = vadd.f32 %v52, %v263
  %v294 = vadd.f32 %v53, %v268
  %v295 = vadd.f32 %v54, %v271
  %v296 = vadd.f32 %v55, %v276
  %v297 = vadd.f32 %v56, %v279
  %298 = vst [vmem:[#allocation2] sm:$0xff] %v282
  %299 = vst [vmem:[#allocation2 + $0x8] sm:$0xff] %v283
  %300 = vst [vmem:[#allocation2 + $0x10] sm:$0xff] %v284
  %301 = vst [vmem:[#allocation2 + $0x18] sm:$0xff] %v285
  %302 = vst [vmem:[#allocation2 + $0x20] sm:$0xff] %v286
  %303 = vst [vmem:[#allocation2 + $0x28] sm:$0xff] %v287
  %304 = vst [vmem:[#allocation2 + $0x30] sm:$0xff] %v288
  %305 = vst [vmem:[#allocation2 + $0x38] sm:$0xff] %v289
  %306 = vst [vmem:[#allocation2 + $0x40] sm:$0xff] %v290
  %307 = vst [vmem:[#allocation2 + $0x48] sm:$0xff] %v291
  %308 = vst [vmem:[#allocation2 + $0x50] sm:$0xff] %v292
  %309 = vst [vmem:[#allocation2 + $0x58] sm:$0xff] %v293
  %310 = vst [vmem:[#allocation2 + $0x60] sm:$0xff] %v294
  %311 = vst [vmem:[#allocation2 + $0x68] sm:$0xff] %v295
  %312 = vst [vmem:[#allocation2 + $0x70] sm:$0xff] %v296
  %313 = vst [vmem:[#allocation2 + $0x78] sm:$0xff] %v297
  // Predicated region
  $region26: #{gcn_pool_block_forward.10} parent=0 // pred_check
    %p314 = pneg %p21
  $region27: #{gcn_pool_block_forward.10} parent=0 // pred_check_branch
    %316 = sbr.rel (%p314) target = $region29
  $region28: #{gcn_pool_block_forward.10} parent=0 // pred_region
    %v317 = vld [vmem:[%s3] sm:$0xff]
    %v318 = vld [vmem:[%s3 + $0x8] sm:$0xff]
    %v319 = vld [vmem:[%s3 + $0x10] sm:$0xff]
    %v320 = vld [vmem:[%s3 + $0x18] sm:$0xff]
    %v321 = vld [vmem:[%s3 + $0x20] sm:$0xff]
    %v322 = vld [vmem:[%s3 + $0x28] sm:$0xff]
    %v323 = vld [vmem:[%s3 + $0x30] sm:$0xff]
    %v324 = vld [vmem:[%s3 + $0x38] sm:$0xff]
    %v325 = vld [vmem:[%s3 + $0x40] sm:$0xff]
    %v326 = vld [vmem:[%s3 + $0x48] sm:$0xff]
    %v327 = vld [vmem:[%s3 + $0x50] sm:$0xff]
    %v328 = vld [vmem:[%s3 + $0x58] sm:$0xff]
    %v329 = vld [vmem:[%s3 + $0x60] sm:$0xff]
    %v330 = vld [vmem:[%s3 + $0x68] sm:$0xff]
    %v331 = vld [vmem:[%s3 + $0x70] sm:$0xff]
    %v332 = vld [vmem:[%s3 + $0x78] sm:$0xff]
    %v333 = vld [vmem:[#allocation2] sm:$0xff]
    %v334 = vld [vmem:[#allocation2 + $0x8] sm:$0xff]
    %v335 = vld [vmem:[#allocation2 + $0x10] sm:$0xff]
    %v336 = vld [vmem:[#allocation2 + $0x18] sm:$0xff]
    %v337 = vld [vmem:[#allocation2 + $0x20] sm:$0xff]
    %v338 = vld [vmem:[#allocation2 + $0x28] sm:$0xff]
    %v339 = vld [vmem:[#allocation2 + $0x30] sm:$0xff]
    %v340 = vld [vmem:[#allocation2 + $0x38] sm:$0xff]
    %v341 = vld [vmem:[#allocation2 + $0x40] sm:$0xff]
    %v342 = vld [vmem:[#allocation2 + $0x48] sm:$0xff]
    %v343 = vld [vmem:[#allocation2 + $0x50] sm:$0xff]
    %v344 = vld [vmem:[#allocation2 + $0x58] sm:$0xff]
    %v345 = vld [vmem:[#allocation2 + $0x60] sm:$0xff]
    %v346 = vld [vmem:[#allocation2 + $0x68] sm:$0xff]
    %v347 = vld [vmem:[#allocation2 + $0x70] sm:$0xff]
    %v348 = vld [vmem:[#allocation2 + $0x78] sm:$0xff]
    %v349 = vld [vmem:[%s2] sm:$0xf]
    %v350 = vld [vmem:[%s2 + $0x4] sm:$0xf]
    %v351 = vld [vmem:[%s2 + $0x8] sm:$0xf]
    %v352 = vld [vmem:[%s2 + $0xc] sm:$0xf]
    %v353 = vld [vmem:[%s2 + $0x10] sm:$0xf]
    %v354 = vld [vmem:[%s2 + $0x14] sm:$0xf]
    %v355 = vld [vmem:[%s2 + $0x18] sm:$0xf]
    %v356 = vld [vmem:[%s2 + $0x1c] sm:$0xf]
    %v357 = vld [vmem:[%s2 + $0x20] sm:$0xf]
    %v358 = vld [vmem:[%s2 + $0x24] sm:$0xf]
    %v359 = vld [vmem:[%s2 + $0x28] sm:$0xf]
    %v360 = vld [vmem:[%s2 + $0x2c] sm:$0xf]
    %v361 = vld [vmem:[%s2 + $0x30] sm:$0xf]
    %v362 = vld [vmem:[%s2 + $0x34] sm:$0xf]
    %v363 = vld [vmem:[%s2 + $0x38] sm:$0xf]
    %v364 = vld [vmem:[%s2 + $0x3c] sm:$0xf]
    %v365 = vunpack.c.l.bf16 %v349
    %v366 = vunpack.c.l.bf16 %v350
    %v367 = vunpack.c.l.bf16 %v351
    %v368 = vunpack.c.l.bf16 %v352
    %v369 = vunpack.c.l.bf16 %v353
    %v370 = vunpack.c.l.bf16 %v354
    %v371 = vunpack.c.l.bf16 %v355
    %v372 = vunpack.c.l.bf16 %v356
    %v373 = vunpack.c.l.bf16 %v357
    %v374 = vunpack.c.l.bf16 %v358
    %v375 = vunpack.c.l.bf16 %v359
    %v376 = vunpack.c.l.bf16 %v360
    %v377 = vunpack.c.l.bf16 %v361
    %v378 = vunpack.c.l.bf16 %v362
    %v379 = vunpack.c.l.bf16 %v363
    %v380 = vunpack.c.l.bf16 %v364
    %v381 = vadd.f32 %v333, %v365
    %v382 = vadd.f32 %v334, %v366
    %v383 = vadd.f32 %v335, %v367
    %v384 = vadd.f32 %v336, %v368
    %v385 = vadd.f32 %v337, %v369
    %v386 = vadd.f32 %v338, %v370
    %v387 = vadd.f32 %v339, %v371
    %v388 = vadd.f32 %v340, %v372
    %v389 = vadd.f32 %v341, %v373
    %v390 = vadd.f32 %v342, %v374
    %v391 = vadd.f32 %v343, %v375
    %v392 = vadd.f32 %v344, %v376
    %v393 = vadd.f32 %v345, %v377
    %v394 = vadd.f32 %v346, %v378
    %v395 = vadd.f32 %v347, %v379
    %v396 = vadd.f32 %v348, %v380
    %398 = vset.pattern.permute.xlu0 0
    %399 = vperm.xlu0 %398, %v317
    %v400 = vpop.permute.xlu0 %399
    %403 = vset.pattern.permute.xlu0 0
    %404 = vperm.xlu0 %403, %v318
    %v405 = vpop.permute.xlu0 %404
    %408 = vset.pattern.permute.xlu0 0
    %409 = vperm.xlu0 %408, %v319
    %v410 = vpop.permute.xlu0 %409
    %413 = vset.pattern.permute.xlu0 0
    %414 = vperm.xlu0 %413, %v320
    %v415 = vpop.permute.xlu0 %414
    %418 = vset.pattern.permute.xlu0 0
    %419 = vperm.xlu0 %418, %v321
    %v420 = vpop.permute.xlu0 %419
    %423 = vset.pattern.permute.xlu0 0
    %424 = vperm.xlu0 %423, %v322
    %v425 = vpop.permute.xlu0 %424
    %428 = vset.pattern.permute.xlu0 0
    %429 = vperm.xlu0 %428, %v323
    %v430 = vpop.permute.xlu0 %429
    %433 = vset.pattern.permute.xlu0 0
    %434 = vperm.xlu0 %433, %v324
    %v435 = vpop.permute.xlu0 %434
    %438 = vset.pattern.permute.xlu0 0
    %439 = vperm.xlu0 %438, %v325
    %v440 = vpop.permute.xlu0 %439
    %443 = vset.pattern.permute.xlu0 0
    %444 = vperm.xlu0 %443, %v326
    %v445 = vpop.permute.xlu0 %444
    %448 = vset.pattern.permute.xlu0 0
    %449 = vperm.xlu0 %448, %v327
    %v450 = vpop.permute.xlu0 %449
    %453 = vset.pattern.permute.xlu0 0
    %454 = vperm.xlu0 %453, %v328
    %v455 = vpop.permute.xlu0 %454
    %458 = vset.pattern.permute.xlu0 0
    %459 = vperm.xlu0 %458, %v329
    %v460 = vpop.permute.xlu0 %459
    %463 = vset.pattern.permute.xlu0 0
    %464 = vperm.xlu0 %463, %v330
    %v465 = vpop.permute.xlu0 %464
    %468 = vset.pattern.permute.xlu0 0
    %469 = vperm.xlu0 %468, %v331
    %v470 = vpop.permute.xlu0 %469
    %473 = vset.pattern.permute.xlu0 0
    %474 = vperm.xlu0 %473, %v332
    %v475 = vpop.permute.xlu0 %474
    %v477 = vmul.f32 %v400, %v381
    %v478 = vmul.f32 %v405, %v382
    %v479 = vmul.f32 %v410, %v383
    %v480 = vmul.f32 %v415, %v384
    %v481 = vmul.f32 %v420, %v385
    %v482 = vmul.f32 %v425, %v386
    %v483 = vmul.f32 %v430, %v387
    %v484 = vmul.f32 %v435, %v388
    %v485 = vmul.f32 %v440, %v389
    %v486 = vmul.f32 %v445, %v390
    %v487 = vmul.f32 %v450, %v391
    %v488 = vmul.f32 %v455, %v392
    %v489 = vmul.f32 %v460, %v393
    %v490 = vmul.f32 %v465, %v394
    %v491 = vmul.f32 %v470, %v395
    %v492 = vmul.f32 %v475, %v396
    %v493 = vld [vmem:[%s4] sm:$0x1]
    %v495 = vlaneseq
    %v496 = vshrl.u32 %v495, 7
    %v497 = vsub.s32 0, %v496
    %v498 = vrot.slane %v493, %v497
    %v500 = vadd.f32 %v477, %v498
    %v501 = vadd.f32 %v478, %v498
    %v502 = vadd.f32 %v479, %v498
    %v503 = vadd.f32 %v480, %v498
    %v504 = vadd.f32 %v481, %v498
    %v505 = vadd.f32 %v482, %v498
    %v506 = vadd.f32 %v483, %v498
    %v507 = vadd.f32 %v484, %v498
    %v508 = vadd.f32 %v485, %v498
    %v509 = vadd.f32 %v486, %v498
    %v510 = vadd.f32 %v487, %v498
    %v511 = vadd.f32 %v488, %v498
    %v512 = vadd.f32 %v489, %v498
    %v513 = vadd.f32 %v490, %v498
    %v514 = vadd.f32 %v491, %v498
    %v515 = vadd.f32 %v492, %v498
    %v516 = vmax.f32 %v500, 0.0
    %v517 = vmax.f32 %v501, 0.0
    %v518 = vmax.f32 %v502, 0.0
    %v519 = vmax.f32 %v503, 0.0
    %v520 = vmax.f32 %v504, 0.0
    %v521 = vmax.f32 %v505, 0.0
    %v522 = vmax.f32 %v506, 0.0
    %v523 = vmax.f32 %v507, 0.0
    %v524 = vmax.f32 %v508, 0.0
    %v525 = vmax.f32 %v509, 0.0
    %v526 = vmax.f32 %v510, 0.0
    %v527 = vmax.f32 %v511, 0.0
    %v528 = vmax.f32 %v512, 0.0
    %v529 = vmax.f32 %v513, 0.0
    %v530 = vmax.f32 %v514, 0.0
    %v531 = vmax.f32 %v515, 0.0
    %vm532 = vcmp.gt.f32.partialorder %v317, 0.0
    %vm533 = vcmp.gt.f32.partialorder %v318, 0.0
    %vm534 = vcmp.gt.f32.partialorder %v319, 0.0
    %vm535 = vcmp.gt.f32.partialorder %v320, 0.0
    %vm536 = vcmp.gt.f32.partialorder %v321, 0.0
    %vm537 = vcmp.gt.f32.partialorder %v322, 0.0
    %vm538 = vcmp.gt.f32.partialorder %v323, 0.0
    %vm539 = vcmp.gt.f32.partialorder %v324, 0.0
    %vm540 = vcmp.gt.f32.partialorder %v325, 0.0
    %vm541 = vcmp.gt.f32.partialorder %v326, 0.0
    %vm542 = vcmp.gt.f32.partialorder %v327, 0.0
    %vm543 = vcmp.gt.f32.partialorder %v328, 0.0
    %vm544 = vcmp.gt.f32.partialorder %v329, 0.0
    %vm545 = vcmp.gt.f32.partialorder %v330, 0.0
    %vm546 = vcmp.gt.f32.partialorder %v331, 0.0
    %vm547 = vcmp.gt.f32.partialorder %v332, 0.0
    %v548 = vsel %vm532, 1, 0
    %v549 = vsel %vm533, 1, 0
    %v550 = vsel %vm534, 1, 0
    %v551 = vsel %vm535, 1, 0
    %v552 = vsel %vm536, 1, 0
    %v553 = vsel %vm537, 1, 0
    %v554 = vsel %vm538, 1, 0
    %v555 = vsel %vm539, 1, 0
    %v556 = vsel %vm540, 1, 0
    %v557 = vsel %vm541, 1, 0
    %v558 = vsel %vm542, 1, 0
    %v559 = vsel %vm543, 1, 0
    %v560 = vsel %vm544, 1, 0
    %v561 = vsel %vm545, 1, 0
    %v562 = vsel %vm546, 1, 0
    %v563 = vsel %vm547, 1, 0
    %564 = vset.pattern.permute.xlu0 0
    %565 = vperm.xlu0 %564, %v548
    %v566 = vpop.permute.xlu0 %565
    %567 = vset.pattern.permute.xlu0 0
    %568 = vperm.xlu0 %567, %v549
    %v569 = vpop.permute.xlu0 %568
    %570 = vset.pattern.permute.xlu0 0
    %571 = vperm.xlu0 %570, %v550
    %v572 = vpop.permute.xlu0 %571
    %573 = vset.pattern.permute.xlu0 0
    %574 = vperm.xlu0 %573, %v551
    %v575 = vpop.permute.xlu0 %574
    %576 = vset.pattern.permute.xlu0 0
    %577 = vperm.xlu0 %576, %v552
    %v578 = vpop.permute.xlu0 %577
    %579 = vset.pattern.permute.xlu0 0
    %580 = vperm.xlu0 %579, %v553
    %v581 = vpop.permute.xlu0 %580
    %582 = vset.pattern.permute.xlu0 0
    %583 = vperm.xlu0 %582, %v554
    %v584 = vpop.permute.xlu0 %583
    %585 = vset.pattern.permute.xlu0 0
    %586 = vperm.xlu0 %585, %v555
    %v587 = vpop.permute.xlu0 %586
    %588 = vset.pattern.permute.xlu0 0
    %589 = vperm.xlu0 %588, %v556
    %v590 = vpop.permute.xlu0 %589
    %591 = vset.pattern.permute.xlu0 0
    %592 = vperm.xlu0 %591, %v557
    %v593 = vpop.permute.xlu0 %592
    %594 = vset.pattern.permute.xlu0 0
    %595 = vperm.xlu0 %594, %v558
    %v596 = vpop.permute.xlu0 %595
    %597 = vset.pattern.permute.xlu0 0
    %598 = vperm.xlu0 %597, %v559
    %v599 = vpop.permute.xlu0 %598
    %600 = vset.pattern.permute.xlu0 0
    %601 = vperm.xlu0 %600, %v560
    %v602 = vpop.permute.xlu0 %601
    %603 = vset.pattern.permute.xlu0 0
    %604 = vperm.xlu0 %603, %v561
    %v605 = vpop.permute.xlu0 %604
    %606 = vset.pattern.permute.xlu0 0
    %607 = vperm.xlu0 %606, %v562
    %v608 = vpop.permute.xlu0 %607
    %609 = vset.pattern.permute.xlu0 0
    %610 = vperm.xlu0 %609, %v563
    %v611 = vpop.permute.xlu0 %610
    %vm612 = vcmp.eq.s32.totalorder %v566, 1
    %vm613 = vcmp.eq.s32.totalorder %v569, 1
    %vm614 = vcmp.eq.s32.totalorder %v572, 1
    %vm615 = vcmp.eq.s32.totalorder %v575, 1
    %vm616 = vcmp.eq.s32.totalorder %v578, 1
    %vm617 = vcmp.eq.s32.totalorder %v581, 1
    %vm618 = vcmp.eq.s32.totalorder %v584, 1
    %vm619 = vcmp.eq.s32.totalorder %v587, 1
    %vm620 = vcmp.eq.s32.totalorder %v590, 1
    %vm621 = vcmp.eq.s32.totalorder %v593, 1
    %vm622 = vcmp.eq.s32.totalorder %v596, 1
    %vm623 = vcmp.eq.s32.totalorder %v599, 1
    %vm624 = vcmp.eq.s32.totalorder %v602, 1
    %vm625 = vcmp.eq.s32.totalorder %v605, 1
    %vm626 = vcmp.eq.s32.totalorder %v608, 1
    %vm627 = vcmp.eq.s32.totalorder %v611, 1
    %v628 = vsel %vm612, %v516, 0.0
    %v629 = vsel %vm613, %v517, 0.0
    %v630 = vsel %vm614, %v518, 0.0
    %v631 = vsel %vm615, %v519, 0.0
    %v632 = vsel %vm616, %v520, 0.0
    %v633 = vsel %vm617, %v521, 0.0
    %v634 = vsel %vm618, %v522, 0.0
    %v635 = vsel %vm619, %v523, 0.0
    %v636 = vsel %vm620, %v524, 0.0
    %v637 = vsel %vm621, %v525, 0.0
    %v638 = vsel %vm622, %v526, 0.0
    %v639 = vsel %vm623, %v527, 0.0
    %v640 = vsel %vm624, %v528, 0.0
    %v641 = vsel %vm625, %v529, 0.0
    %v642 = vsel %vm626, %v530, 0.0
    %v643 = vsel %vm627, %v531, 0.0
    %v644 = vpack.c.bf16 %v629, %v628
    %v645 = vpack.c.bf16 %v631, %v630
    %v646 = vpack.c.bf16 %v633, %v632
    %v647 = vpack.c.bf16 %v635, %v634
    %v648 = vpack.c.bf16 %v637, %v636
    %v649 = vpack.c.bf16 %v639, %v638
    %v650 = vpack.c.bf16 %v641, %v640
    %v651 = vpack.c.bf16 %v643, %v642
    %v660 = vunpack.c.l.b16 %v644
    %v661 = vunpack.c.h.b16 %v644
    %v662 = vunpack.c.l.b16 %v645
    %v663 = vunpack.c.h.b16 %v645
    %v664 = vunpack.c.l.b16 %v646
    %v665 = vunpack.c.h.b16 %v646
    %v666 = vunpack.c.l.b16 %v647
    %v667 = vunpack.c.h.b16 %v647
    %v668 = vunpack.c.l.b16 %v648
    %v669 = vunpack.c.h.b16 %v648
    %v670 = vunpack.c.l.b16 %v649
    %v671 = vunpack.c.h.b16 %v649
    %v672 = vunpack.c.l.b16 %v650
    %v673 = vunpack.c.h.b16 %v650
    %v674 = vunpack.c.l.b16 %v651
    %v675 = vunpack.c.h.b16 %v651
    %v676 = vpack.c.b16 %v660, %v660
    %v677 = vpack.c.b16 %v661, %v661
    %v678 = vpack.c.b16 %v662, %v662
    %v679 = vpack.c.b16 %v663, %v663
    %v680 = vpack.c.b16 %v664, %v664
    %v681 = vpack.c.b16 %v665, %v665
    %v682 = vpack.c.b16 %v666, %v666
    %v683 = vpack.c.b16 %v667, %v667
    %v684 = vpack.c.b16 %v668, %v668
    %v685 = vpack.c.b16 %v669, %v669
    %v686 = vpack.c.b16 %v670, %v670
    %v687 = vpack.c.b16 %v671, %v671
    %v688 = vpack.c.b16 %v672, %v672
    %v689 = vpack.c.b16 %v673, %v673
    %v690 = vpack.c.b16 %v674, %v674
    %v691 = vpack.c.b16 %v675, %v675
    %708 = vst [vmem:[%s5] sm:$0xf] %v676
    %709 = vst [vmem:[%s5 + $0x4] sm:$0xf] %v677
    %710 = vst [vmem:[%s5 + $0x8] sm:$0xf] %v678
    %711 = vst [vmem:[%s5 + $0xc] sm:$0xf] %v679
    %712 = vst [vmem:[%s5 + $0x10] sm:$0xf] %v680
    %713 = vst [vmem:[%s5 + $0x14] sm:$0xf] %v681
    %714 = vst [vmem:[%s5 + $0x18] sm:$0xf] %v682
    %715 = vst [vmem:[%s5 + $0x1c] sm:$0xf] %v683
    %716 = vst [vmem:[%s5 + $0x20] sm:$0xf] %v684
    %717 = vst [vmem:[%s5 + $0x24] sm:$0xf] %v685
    %718 = vst [vmem:[%s5 + $0x28] sm:$0xf] %v686
    %719 = vst [vmem:[%s5 + $0x2c] sm:$0xf] %v687
    %720 = vst [vmem:[%s5 + $0x30] sm:$0xf] %v688
    %721 = vst [vmem:[%s5 + $0x34] sm:$0xf] %v689
    %722 = vst [vmem:[%s5 + $0x38] sm:$0xf] %v690
    %723 = vst [vmem:[%s5 + $0x3c] sm:$0xf] %v691
  $region29: #{gcn_pool_block_forward.10} parent=0 // pred_fallthru
    _
  // Predicated region
  $region30: #{gcn_pool_block_forward.10} parent=0 // pred_check
    _
  $region31: #{gcn_pool_block_forward.10} parent=0 // pred_check_branch
    %725 = sbr.rel (0) target = $region33
  $region32: #{gcn_pool_block_forward.10} parent=0 // pred_region
    _
  $region33: #{gcn_pool_block_forward.10} parent=0 // pred_fallthru
    _
  // Predicated region
  $region34: #{gcn_pool_block_forward.10} parent=0 // pred_check
    _
  $region35: #{gcn_pool_block_forward.10} parent=0 // pred_check_branch
    %727 = sbr.rel (0) target = $region37
  $region36: #{gcn_pool_block_forward.10} parent=0 // pred_region
    _
  $region37: #{gcn_pool_block_forward.10} parent=0 // pred_fallthru
    _

// kernel: gcn_pool_block_forward.9
$region0: #{gcn_pool_block_forward.9}
  #allocation0 [shape = 'u32[]', space=smem, size = 0x4, offset = 0x4, fixed_abs, tag = 'smem constant byte address 0x4 - core index']
  #allocation1 [shape = 'u32[144,128]{1,0:T(1,128)}', space=vmem, size = 0x12000, scoped, tag = 'internal scratch']
  %s0 = inlined_call_operand.vmem [shape: bf16[128,128], index: 0, kind: input, shape index: {}]
  %s1 = inlined_call_operand.vmem [shape: bf16[128,128], index: 1, kind: input, shape index: {}]
  %s2 = inlined_call_operand.vmem [shape: f32[128,1], index: 2, kind: input, shape index: {}]
  %s3 = inlined_call_operand.vmem [shape: bf16[128,128], index: 3, kind: output, shape index: {}]
  %s4 = sld [smem:[#allocation0]]
  $region22: #{gcn_pool_block_forward.9} parent=0
    _
  %s6 = ssub.s32 1, %s4
  %s7 = scalar_select 0, %s6, %s4
  // Predicated region
  $region2: #{gcn_pool_block_forward.9} parent=0 // pred_check
    _
  $region3: #{gcn_pool_block_forward.9} parent=0 // pred_check_branch
    %9 = sbr.rel (0) target = $region5
  $region4: #{gcn_pool_block_forward.9} parent=0 // pred_region
    _
  $region5: #{gcn_pool_block_forward.9} parent=0 // pred_fallthru
    _
  // Predicated region
  $region6: #{gcn_pool_block_forward.9} parent=0 // pred_check
    _
  $region7: #{gcn_pool_block_forward.9} parent=0 // pred_check_branch
    %11 = sbr.rel (0) target = $region9
  $region8: #{gcn_pool_block_forward.9} parent=0 // pred_region
    _
  $region9: #{gcn_pool_block_forward.9} parent=0 // pred_fallthru
    _
  // Predicated region
  $region10: #{gcn_pool_block_forward.9} parent=0 // pred_check
    _
  $region11: #{gcn_pool_block_forward.9} parent=0 // pred_check_branch
    %13 = sbr.rel (0) target = $region13
  $region12: #{gcn_pool_block_forward.9} parent=0 // pred_region
    _
  $region13: #{gcn_pool_block_forward.9} parent=0 // pred_fallthru
    _
  %v15 = vld [vmem:[%s0] sm:$0xf]
  %v16 = vld [vmem:[%s0 + $0x4] sm:$0xf]
  %v17 = vld [vmem:[%s0 + $0x8] sm:$0xf]
  %v18 = vld [vmem:[%s0 + $0xc] sm:$0xf]
  %v19 = vld [vmem:[%s0 + $0x10] sm:$0xf]
  %v20 = vld [vmem:[%s0 + $0x14] sm:$0xf]
  %v21 = vld [vmem:[%s0 + $0x18] sm:$0xf]
  %v22 = vld [vmem:[%s0 + $0x1c] sm:$0xf]
  %v23 = vld [vmem:[%s0 + $0x20] sm:$0xf]
  %v24 = vld [vmem:[%s0 + $0x24] sm:$0xf]
  %v25 = vld [vmem:[%s0 + $0x28] sm:$0xf]
  %v26 = vld [vmem:[%s0 + $0x2c] sm:$0xf]
  %v27 = vld [vmem:[%s0 + $0x30] sm:$0xf]
  %v28 = vld [vmem:[%s0 + $0x34] sm:$0xf]
  %v29 = vld [vmem:[%s0 + $0x38] sm:$0xf]
  %v30 = vld [vmem:[%s0 + $0x3c] sm:$0xf]
  %v31 = vld [vmem:[%s1] sm:$0xf]
  %v32 = vld [vmem:[%s1 + $0x4] sm:$0xf]
  %v33 = vld [vmem:[%s1 + $0x8] sm:$0xf]
  %v34 = vld [vmem:[%s1 + $0xc] sm:$0xf]
  %v35 = vld [vmem:[%s1 + $0x10] sm:$0xf]
  %v36 = vld [vmem:[%s1 + $0x14] sm:$0xf]
  %v37 = vld [vmem:[%s1 + $0x18] sm:$0xf]
  %v38 = vld [vmem:[%s1 + $0x1c] sm:$0xf]
  %v39 = vld [vmem:[%s1 + $0x20] sm:$0xf]
  %v40 = vld [vmem:[%s1 + $0x24] sm:$0xf]
  %v41 = vld [vmem:[%s1 + $0x28] sm:$0xf]
  %v42 = vld [vmem:[%s1 + $0x2c] sm:$0xf]
  %v43 = vld [vmem:[%s1 + $0x30] sm:$0xf]
  %v44 = vld [vmem:[%s1 + $0x34] sm:$0xf]
  %v45 = vld [vmem:[%s1 + $0x38] sm:$0xf]
  %v46 = vld [vmem:[%s1 + $0x3c] sm:$0xf]
  %v63 = vunpack.c.l.b16 %v15
  %v64 = vunpack.c.l.b16 %v16
  %v65 = vunpack.c.l.b16 %v17
  %v66 = vunpack.c.l.b16 %v18
  %v67 = vunpack.c.l.b16 %v19
  %v68 = vunpack.c.l.b16 %v20
  %v69 = vunpack.c.l.b16 %v21
  %v70 = vunpack.c.l.b16 %v22
  %v71 = vunpack.c.l.b16 %v23
  %v72 = vunpack.c.l.b16 %v24
  %v73 = vunpack.c.l.b16 %v25
  %v74 = vunpack.c.l.b16 %v26
  %v75 = vunpack.c.l.b16 %v27
  %v76 = vunpack.c.l.b16 %v28
  %v77 = vunpack.c.l.b16 %v29
  %v78 = vunpack.c.l.b16 %v30
  %v79 = vpack.c.b16 %v64, %v63
  %v80 = vpack.c.b16 %v66, %v65
  %v81 = vpack.c.b16 %v68, %v67
  %v82 = vpack.c.b16 %v70, %v69
  %v83 = vpack.c.b16 %v72, %v71
  %v84 = vpack.c.b16 %v74, %v73
  %v85 = vpack.c.b16 %v76, %v75
  %v86 = vpack.c.b16 %v78, %v77
  %v111 = vunpack.c.l.b16 %v31
  %v112 = vunpack.c.l.b16 %v32
  %v113 = vunpack.c.l.b16 %v33
  %v114 = vunpack.c.l.b16 %v34
  %v115 = vunpack.c.l.b16 %v35
  %v116 = vunpack.c.l.b16 %v36
  %v117 = vunpack.c.l.b16 %v37
  %v118 = vunpack.c.l.b16 %v38
  %v119 = vunpack.c.l.b16 %v39
  %v120 = vunpack.c.l.b16 %v40
  %v121 = vunpack.c.l.b16 %v41
  %v122 = vunpack.c.l.b16 %v42
  %v123 = vunpack.c.l.b16 %v43
  %v124 = vunpack.c.l.b16 %v44
  %v125 = vunpack.c.l.b16 %v45
  %v126 = vunpack.c.l.b16 %v46
  %v127 = vpack.c.b16 %v112, %v111
  %v128 = vpack.c.b16 %v114, %v113
  %v129 = vpack.c.b16 %v116, %v115
  %v130 = vpack.c.b16 %v118, %v117
  %v131 = vpack.c.b16 %v120, %v119
  %v132 = vpack.c.b16 %v122, %v121
  %v133 = vpack.c.b16 %v124, %v123
  %v134 = vpack.c.b16 %v126, %v125
  %143 = vmatprep.subr.bf16.mxu0 0
  %144 = vmatpush1.bf16.msra.mxu0 %v127
  %145 = vmatprep.subr.bf16.mxu0 0
  %146 = vmatpush1.bf16.msra.mxu0 %v128
  %147 = vmatprep.subr.bf16.mxu0 0
  %148 = vmatpush1.bf16.msra.mxu0 %v129
  %149 = vmatprep.subr.bf16.mxu0 0
  %150 = vmatpush1.bf16.msra.mxu0 %v130
  %151 = vmatprep.subr.bf16.mxu0 0
  %152 = vmatpush1.bf16.msra.mxu0 %v131
  %153 = vmatprep.subr.bf16.mxu0 0
  %154 = vmatpush1.bf16.msra.mxu0 %v132
  %155 = vmatprep.subr.bf16.mxu0 0
  %156 = vmatpush1.bf16.msra.mxu0 %v133
  %157 = vmatprep.subr.bf16.mxu0 0
  %158 = vmatpush1.bf16.msra.mxu0 %v134
  %159 = vmatprep.subr.bf16.mxu0 0
  %160 = vmatpush1.bf16.msra.mxu0 0
  %161 = vmatprep.subr.bf16.mxu0 0
  %162 = vmatpush1.bf16.msra.mxu0 0
  %163 = vmatprep.subr.bf16.mxu0 0
  %164 = vmatpush1.bf16.msra.mxu0 0
  %165 = vmatprep.subr.bf16.mxu0 0
  %166 = vmatpush1.bf16.msra.mxu0 0
  %167 = vmatprep.subr.bf16.mxu0 0
  %168 = vmatpush1.bf16.msra.mxu0 0
  %169 = vmatprep.subr.bf16.mxu0 0
  %170 = vmatpush1.bf16.msra.mxu0 0
  %171 = vmatprep.subr.bf16.mxu0 0
  %172 = vmatpush1.bf16.msra.mxu0 0
  %173 = vmatprep.subr.bf16.mxu0 0
  %174 = vmatpush1.bf16.msra.mxu0 0
  %175 = vmatprep.mubr.bf16.mxu0 0
  %176 = vmatmul.mubr.bf16.gmra.mrb[0].mxu0 %v79
  %v177 = vpop.f32.mrb[0].mxu0
  %v178 = vadd.f32 0.0, %v177
  %v179 = vpop.f32.mrb[0].mxu0
  %v180 = vpop.f32.mrb[0].mxu0
  %v181 = vadd.f32 0.0, %v180
  %v182 = vpop.f32.mrb[0].mxu0
  %183 = vmatprep.mubr.bf16.mxu0 0
  %184 = vmatmul.mubr.bf16.gmra.mrb[0].mxu0 %v80
  %v185 = vpop.f32.mrb[0].mxu0
  %v186 = vadd.f32 0.0, %v185
  %v187 = vpop.f32.mrb[0].mxu0
  %v188 = vpop.f32.mrb[0].mxu0
  %v189 = vadd.f32 0.0, %v188
  %v190 = vpop.f32.mrb[0].mxu0
  %191 = vmatprep.mubr.bf16.mxu0 0
  %192 = vmatmul.mubr.bf16.gmra.mrb[0].mxu0 %v81
  %v193 = vpop.f32.mrb[0].mxu0
  %v194 = vadd.f32 0.0, %v193
  %v195 = vpop.f32.mrb[0].mxu0
  %v196 = vpop.f32.mrb[0].mxu0
  %v197 = vadd.f32 0.0, %v196
  %v198 = vpop.f32.mrb[0].mxu0
  %199 = vmatprep.mubr.bf16.mxu0 0
  %200 = vmatmul.mubr.bf16.gmra.mrb[0].mxu0 %v82
  %v201 = vpop.f32.mrb[0].mxu0
  %v202 = vadd.f32 0.0, %v201
  %v203 = vpop.f32.mrb[0].mxu0
  %v204 = vpop.f32.mrb[0].mxu0
  %v205 = vadd.f32 0.0, %v204
  %v206 = vpop.f32.mrb[0].mxu0
  %207 = vmatprep.mubr.bf16.mxu0 0
  %208 = vmatmul.mubr.bf16.gmra.mrb[0].mxu0 %v83
  %v209 = vpop.f32.mrb[0].mxu0
  %v210 = vadd.f32 0.0, %v209
  %v211 = vpop.f32.mrb[0].mxu0
  %v212 = vpop.f32.mrb[0].mxu0
  %v213 = vadd.f32 0.0, %v212
  %v214 = vpop.f32.mrb[0].mxu0
  %215 = vmatprep.mubr.bf16.mxu0 0
  %216 = vmatmul.mubr.bf16.gmra.mrb[0].mxu0 %v84
  %v217 = vpop.f32.mrb[0].mxu0
  %v218 = vadd.f32 0.0, %v217
  %v219 = vpop.f32.mrb[0].mxu0
  %v220 = vpop.f32.mrb[0].mxu0
  %v221 = vadd.f32 0.0, %v220
  %v222 = vpop.f32.mrb[0].mxu0
  %223 = vmatprep.mubr.bf16.mxu0 0
  %224 = vmatmul.mubr.bf16.gmra.mrb[0].mxu0 %v85
  %v225 = vpop.f32.mrb[0].mxu0
  %v226 = vadd.f32 0.0, %v225
  %v227 = vpop.f32.mrb[0].mxu0
  %v228 = vpop.f32.mrb[0].mxu0
  %v229 = vadd.f32 0.0, %v228
  %v230 = vpop.f32.mrb[0].mxu0
  %231 = vmatprep.mubr.bf16.mxu0 0
  %232 = vmatmul.mubr.bf16.gmra.mrb[0].mxu0 %v86
  %v233 = vpop.f32.mrb[0].mxu0
  %v234 = vadd.f32 0.0, %v233
  %v235 = vpop.f32.mrb[0].mxu0
  %v236 = vpop.f32.mrb[0].mxu0
  %v237 = vadd.f32 0.0, %v236
  %v238 = vpop.f32.mrb[0].mxu0
  %239 = vdwg.mxu0
  %v240 = vld [vmem:[%s2] sm:$0xff]
  %v241 = vld [vmem:[%s2 + $0x8] sm:$0xff]
  %v242 = vld [vmem:[%s2 + $0x10] sm:$0xff]
  %v243 = vld [vmem:[%s2 + $0x18] sm:$0xff]
  %v244 = vld [vmem:[%s2 + $0x20] sm:$0xff]
  %v245 = vld [vmem:[%s2 + $0x28] sm:$0xff]
  %v246 = vld [vmem:[%s2 + $0x30] sm:$0xff]
  %v247 = vld [vmem:[%s2 + $0x38] sm:$0xff]
  %v248 = vld [vmem:[%s2 + $0x40] sm:$0xff]
  %v249 = vld [vmem:[%s2 + $0x48] sm:$0xff]
  %v250 = vld [vmem:[%s2 + $0x50] sm:$0xff]
  %v251 = vld [vmem:[%s2 + $0x58] sm:$0xff]
  %v252 = vld [vmem:[%s2 + $0x60] sm:$0xff]
  %v253 = vld [vmem:[%s2 + $0x68] sm:$0xff]
  %v254 = vld [vmem:[%s2 + $0x70] sm:$0xff]
  %v255 = vld [vmem:[%s2 + $0x78] sm:$0xff]
  %257 = vset.pattern.permute.xlu0 0
  %258 = vperm.xlu0 %257, %v240
  %v259 = vpop.permute.xlu0 %258
  %262 = vset.pattern.permute.xlu0 0
  %263 = vperm.xlu0 %262, %v241
  %v264 = vpop.permute.xlu0 %263
  %267 = vset.pattern.permute.xlu0 0
  %268 = vperm.xlu0 %267, %v242
  %v269 = vpop.permute.xlu0 %268
  %272 = vset.pattern.permute.xlu0 0
  %273 = vperm.xlu0 %272, %v243
  %v274 = vpop.permute.xlu0 %273
  %277 = vset.pattern.permute.xlu0 0
  %278 = vperm.xlu0 %277, %v244
  %v279 = vpop.permute.xlu0 %278
  %282 = vset.pattern.permute.xlu0 0
  %283 = vperm.xlu0 %282, %v245
  %v284 = vpop.permute.xlu0 %283
  %287 = vset.pattern.permute.xlu0 0
  %288 = vperm.xlu0 %287, %v246
  %v289 = vpop.permute.xlu0 %288
  %292 = vset.pattern.permute.xlu0 0
  %293 = vperm.xlu0 %292, %v247
  %v294 = vpop.permute.xlu0 %293
  %297 = vset.pattern.permute.xlu0 0
  %298 = vperm.xlu0 %297, %v248
  %v299 = vpop.permute.xlu0 %298
  %302 = vset.pattern.permute.xlu0 0
  %303 = vperm.xlu0 %302, %v249
  %v304 = vpop.permute.xlu0 %303
  %307 = vset.pattern.permute.xlu0 0
  %308 = vperm.xlu0 %307, %v250
  %v309 = vpop.permute.xlu0 %308
  %312 = vset.pattern.permute.xlu0 0
  %313 = vperm.xlu0 %312, %v251
  %v314 = vpop.permute.xlu0 %313
  %317 = vset.pattern.permute.xlu0 0
  %318 = vperm.xlu0 %317, %v252
  %v319 = vpop.permute.xlu0 %318
  %322 = vset.pattern.permute.xlu0 0
  %323 = vperm.xlu0 %322, %v253
  %v324 = vpop.permute.xlu0 %323
  %327 = vset.pattern.permute.xlu0 0
  %328 = vperm.xlu0 %327, %v254
  %v329 = vpop.permute.xlu0 %328
  %332 = vset.pattern.permute.xlu0 0
  %333 = vperm.xlu0 %332, %v255
  %v334 = vpop.permute.xlu0 %333
  %v336 = vmul.f32 %v178, %v259
  %v337 = vmul.f32 %v181, %v264
  %v338 = vmul.f32 %v186, %v269
  %v339 = vmul.f32 %v189, %v274
  %v340 = vmul.f32 %v194, %v279
  %v341 = vmul.f32 %v197, %v284
  %v342 = vmul.f32 %v202, %v289
  %v343 = vmul.f32 %v205, %v294
  %v344 = vmul.f32 %v210, %v299
  %v345 = vmul.f32 %v213, %v304
  %v346 = vmul.f32 %v218, %v309
  %v347 = vmul.f32 %v221, %v314
  %v348 = vmul.f32 %v226, %v319
  %v349 = vmul.f32 %v229, %v324
  %v350 = vmul.f32 %v234, %v329
  %v351 = vmul.f32 %v237, %v334
  %v352 = vpack.c.bf16 %v337, %v336
  %v353 = vpack.c.bf16 %v339, %v338
  %v354 = vpack.c.bf16 %v341, %v340
  %v355 = vpack.c.bf16 %v343, %v342
  %v356 = vpack.c.bf16 %v345, %v344
  %v357 = vpack.c.bf16 %v347, %v346
  %v358 = vpack.c.bf16 %v349, %v348
  %v359 = vpack.c.bf16 %v351, %v350
  %v368 = vunpack.c.l.b16 %v352
  %v369 = vunpack.c.h.b16 %v352
  %v370 = vunpack.c.l.b16 %v353
  %v371 = vunpack.c.h.b16 %v353
  %v372 = vunpack.c.l.b16 %v354
  %v373 = vunpack.c.h.b16 %v354
  %v374 = vunpack.c.l.b16 %v355
  %v375 = vunpack.c.h.b16 %v355
  %v376 = vunpack.c.l.b16 %v356
  %v377 = vunpack.c.h.b16 %v356
  %v378 = vunpack.c.l.b16 %v357
  %v379 = vunpack.c.h.b16 %v357
  %v380 = vunpack.c.l.b16 %v358
  %v381 = vunpack.c.h.b16 %v358
  %v382 = vunpack.c.l.b16 %v359
  %v383 = vunpack.c.h.b16 %v359
  %v384 = vpack.c.b16 %v368, %v368
  %v385 = vpack.c.b16 %v369, %v369
  %v386 = vpack.c.b16 %v370, %v370
  %v387 = vpack.c.b16 %v371, %v371
  %v388 = vpack.c.b16 %v372, %v372
  %v389 = vpack.c.b16 %v373, %v373
  %v390 = vpack.c.b16 %v374, %v374
  %v391 = vpack.c.b16 %v375, %v375
  %v392 = vpack.c.b16 %v376, %v376
  %v393 = vpack.c.b16 %v377, %v377
  %v394 = vpack.c.b16 %v378, %v378
  %v395 = vpack.c.b16 %v379, %v379
  %v396 = vpack.c.b16 %v380, %v380
  %v397 = vpack.c.b16 %v381, %v381
  %v398 = vpack.c.b16 %v382, %v382
  %v399 = vpack.c.b16 %v383, %v383
  %416 = vst [vmem:[%s3] sm:$0xf] %v384
  %417 = vst [vmem:[%s3 + $0x4] sm:$0xf] %v385
  %418 = vst [vmem:[%s3 + $0x8] sm:$0xf] %v386
  %419 = vst [vmem:[%s3 + $0xc] sm:$0xf] %v387
  %420 = vst [vmem:[%s3 + $0x10] sm:$0xf] %v388
  %421 = vst [vmem:[%s3 + $0x14] sm:$0xf] %v389
  %422 = vst [vmem:[%s3 + $0x18] sm:$0xf] %v390
  %423 = vst [vmem:[%s3 + $0x1c] sm:$0xf] %v391
  %424 = vst [vmem:[%s3 + $0x20] sm:$0xf] %v392
  %425 = vst [vmem:[%s3 + $0x24] sm:$0xf] %v393
  %426 = vst [vmem:[%s3 + $0x28] sm:$0xf] %v394
  %427 = vst [vmem:[%s3 + $0x2c] sm:$0xf] %v395
  %428 = vst [vmem:[%s3 + $0x30] sm:$0xf] %v396
  %429 = vst [vmem:[%s3 + $0x34] sm:$0xf] %v397
  %430 = vst [vmem:[%s3 + $0x38] sm:$0xf] %v398
  %431 = vst [vmem:[%s3 + $0x3c] sm:$0xf] %v399
  // Predicated region
  $region14: #{gcn_pool_block_forward.9} parent=0 // pred_check
    _
  $region15: #{gcn_pool_block_forward.9} parent=0 // pred_check_branch
    %433 = sbr.rel (0) target = $region17
  $region16: #{gcn_pool_block_forward.9} parent=0 // pred_region
    _
  $region17: #{gcn_pool_block_forward.9} parent=0 // pred_fallthru
    _
  // Predicated region
  $region18: #{gcn_pool_block_forward.9} parent=0 // pred_check
    _
  $region19: #{gcn_pool_block_forward.9} parent=0 // pred_check_branch
    %435 = sbr.rel (0) target = $region21
  $region20: #{gcn_pool_block_forward.9} parent=0 // pred_region
    _
  $region21: #{gcn_pool_block_forward.9} parent=0 // pred_fallthru
    _

// kernel: gcn_pool_block_forward.11
$region0: #{gcn_pool_block_forward.11}
  #allocation0 [shape = 'u32[]', space=smem, size = 0x4, offset = 0x4, fixed_abs, tag = 'smem constant byte address 0x4 - core index']
  #allocation1 [shape = 'u32[144,128]{1,0:T(1,128)}', space=vmem, size = 0x12000, scoped, tag = 'internal scratch']
  #allocation2 [shape = 'f32[8,128]{1,0:T(8,128)}', space=vmem, size = 0x1000, scoped, tag = 'scratch operand']
  #allocation3 [shape = 'f32[8,128]{1,0:T(8,128)}', space=vmem, size = 0x1000, scoped, tag = 'scratch operand']
  %s0 = inlined_call_operand.vmem [shape: bf16[128,128], index: 0, kind: input, shape index: {}]
  %s1 = inlined_call_operand.vmem [shape: f32[128,1], index: 1, kind: input, shape index: {}]
  %s2 = inlined_call_operand.vmem [shape: s32[128,1], index: 2, kind: input, shape index: {}]
  %s3 = inlined_call_operand.vmem [shape: f32[8,1], index: 3, kind: input, shape index: {}]
  %s4 = inlined_call_operand.vmem [shape: f32[8,256], index: 4, kind: output, shape index: {}]
  %s5 = sld [smem:[#allocation0]]
  $region34: #{gcn_pool_block_forward.11} parent=0
    _
  %s7 = ssub.s32 1, %s5
  %s8 = scalar_select 0, %s7, %s5
  // Predicated region
  $region2: #{gcn_pool_block_forward.11} parent=0 // pred_check
    _
  $region3: #{gcn_pool_block_forward.11} parent=0 // pred_check_branch
    %10 = sbr.rel (0) target = $region5
  $region4: #{gcn_pool_block_forward.11} parent=0 // pred_region
    _
  $region5: #{gcn_pool_block_forward.11} parent=0 // pred_fallthru
    _
  // Predicated region
  $region6: #{gcn_pool_block_forward.11} parent=0 // pred_check
    _
  $region7: #{gcn_pool_block_forward.11} parent=0 // pred_check_branch
    %12 = sbr.rel (0) target = $region9
  $region8: #{gcn_pool_block_forward.11} parent=0 // pred_region
    _
  $region9: #{gcn_pool_block_forward.11} parent=0 // pred_fallthru
    _
  // Predicated region
  $region10: #{gcn_pool_block_forward.11} parent=0 // pred_check
    _
  $region11: #{gcn_pool_block_forward.11} parent=0 // pred_check_branch
    %14 = sbr.rel (0) target = $region13
  $region12: #{gcn_pool_block_forward.11} parent=0 // pred_region
    _
  $region13: #{gcn_pool_block_forward.11} parent=0 // pred_fallthru
    _
  // Predicated region
  $region14: #{gcn_pool_block_forward.11} parent=0 // pred_check
    _
  $region15: #{gcn_pool_block_forward.11} parent=0 // pred_check_branch
    %16 = sbr.rel (0) target = $region17
  $region16: #{gcn_pool_block_forward.11} parent=0 // pred_region
    _
  $region17: #{gcn_pool_block_forward.11} parent=0 // pred_fallthru
    _
  %p17 = scmp.eq.s32.totalorder 0, 0
  // Predicated region
  $region18: #{gcn_pool_block_forward.11} parent=0 // pred_check
    %p18 = pneg %p17
  $region19: #{gcn_pool_block_forward.11} parent=0 // pred_check_branch
    %20 = sbr.rel (%p18) target = $region21
  $region20: #{gcn_pool_block_forward.11} parent=0 // pred_region
    %21 = vst [vmem:[#allocation2] sm:$0xff] -3e+38
    %22 = vst [vmem:[#allocation3] sm:$0xff] 0.0
  $region21: #{gcn_pool_block_forward.11} parent=0 // pred_fallthru
    _
  %v23 = vld [vmem:[%s0] sm:$0xf]
  %v24 = vld [vmem:[%s0 + $0x4] sm:$0xf]
  %v25 = vld [vmem:[%s0 + $0x8] sm:$0xf]
  %v26 = vld [vmem:[%s0 + $0xc] sm:$0xf]
  %v27 = vld [vmem:[%s0 + $0x10] sm:$0xf]
  %v28 = vld [vmem:[%s0 + $0x14] sm:$0xf]
  %v29 = vld [vmem:[%s0 + $0x18] sm:$0xf]
  %v30 = vld [vmem:[%s0 + $0x1c] sm:$0xf]
  %v31 = vld [vmem:[%s0 + $0x20] sm:$0xf]
  %v32 = vld [vmem:[%s0 + $0x24] sm:$0xf]
  %v33 = vld [vmem:[%s0 + $0x28] sm:$0xf]
  %v34 = vld [vmem:[%s0 + $0x2c] sm:$0xf]
  %v35 = vld [vmem:[%s0 + $0x30] sm:$0xf]
  %v36 = vld [vmem:[%s0 + $0x34] sm:$0xf]
  %v37 = vld [vmem:[%s0 + $0x38] sm:$0xf]
  %v38 = vld [vmem:[%s0 + $0x3c] sm:$0xf]
  %v39 = vunpack.c.l.bf16 %v23
  %v40 = vunpack.c.l.bf16 %v24
  %v41 = vunpack.c.l.bf16 %v25
  %v42 = vunpack.c.l.bf16 %v26
  %v43 = vunpack.c.l.bf16 %v27
  %v44 = vunpack.c.l.bf16 %v28
  %v45 = vunpack.c.l.bf16 %v29
  %v46 = vunpack.c.l.bf16 %v30
  %v47 = vunpack.c.l.bf16 %v31
  %v48 = vunpack.c.l.bf16 %v32
  %v49 = vunpack.c.l.bf16 %v33
  %v50 = vunpack.c.l.bf16 %v34
  %v51 = vunpack.c.l.bf16 %v35
  %v52 = vunpack.c.l.bf16 %v36
  %v53 = vunpack.c.l.bf16 %v37
  %v54 = vunpack.c.l.bf16 %v38
  %v55 = vld [vmem:[%s1] sm:$0xff]
  %v56 = vld [vmem:[%s1 + $0x8] sm:$0xff]
  %v57 = vld [vmem:[%s1 + $0x10] sm:$0xff]
  %v58 = vld [vmem:[%s1 + $0x18] sm:$0xff]
  %v59 = vld [vmem:[%s1 + $0x20] sm:$0xff]
  %v60 = vld [vmem:[%s1 + $0x28] sm:$0xff]
  %v61 = vld [vmem:[%s1 + $0x30] sm:$0xff]
  %v62 = vld [vmem:[%s1 + $0x38] sm:$0xff]
  %v63 = vld [vmem:[%s1 + $0x40] sm:$0xff]
  %v64 = vld [vmem:[%s1 + $0x48] sm:$0xff]
  %v65 = vld [vmem:[%s1 + $0x50] sm:$0xff]
  %v66 = vld [vmem:[%s1 + $0x58] sm:$0xff]
  %v67 = vld [vmem:[%s1 + $0x60] sm:$0xff]
  %v68 = vld [vmem:[%s1 + $0x68] sm:$0xff]
  %v69 = vld [vmem:[%s1 + $0x70] sm:$0xff]
  %v70 = vld [vmem:[%s1 + $0x78] sm:$0xff]
  %72 = vset.pattern.permute.xlu0 0
  %73 = vperm.xlu0 %72, %v55
  %v74 = vpop.permute.xlu0 %73
  %77 = vset.pattern.permute.xlu0 0
  %78 = vperm.xlu0 %77, %v56
  %v79 = vpop.permute.xlu0 %78
  %82 = vset.pattern.permute.xlu0 0
  %83 = vperm.xlu0 %82, %v57
  %v84 = vpop.permute.xlu0 %83
  %87 = vset.pattern.permute.xlu0 0
  %88 = vperm.xlu0 %87, %v58
  %v89 = vpop.permute.xlu0 %88
  %92 = vset.pattern.permute.xlu0 0
  %93 = vperm.xlu0 %92, %v59
  %v94 = vpop.permute.xlu0 %93
  %97 = vset.pattern.permute.xlu0 0
  %98 = vperm.xlu0 %97, %v60
  %v99 = vpop.permute.xlu0 %98
  %102 = vset.pattern.permute.xlu0 0
  %103 = vperm.xlu0 %102, %v61
  %v104 = vpop.permute.xlu0 %103
  %107 = vset.pattern.permute.xlu0 0
  %108 = vperm.xlu0 %107, %v62
  %v109 = vpop.permute.xlu0 %108
  %112 = vset.pattern.permute.xlu0 0
  %113 = vperm.xlu0 %112, %v63
  %v114 = vpop.permute.xlu0 %113
  %117 = vset.pattern.permute.xlu0 0
  %118 = vperm.xlu0 %117, %v64
  %v119 = vpop.permute.xlu0 %118
  %122 = vset.pattern.permute.xlu0 0
  %123 = vperm.xlu0 %122, %v65
  %v124 = vpop.permute.xlu0 %123
  %127 = vset.pattern.permute.xlu0 0
  %128 = vperm.xlu0 %127, %v66
  %v129 = vpop.permute.xlu0 %128
  %132 = vset.pattern.permute.xlu0 0
  %133 = vperm.xlu0 %132, %v67
  %v134 = vpop.permute.xlu0 %133
  %137 = vset.pattern.permute.xlu0 0
  %138 = vperm.xlu0 %137, %v68
  %v139 = vpop.permute.xlu0 %138
  %142 = vset.pattern.permute.xlu0 0
  %143 = vperm.xlu0 %142, %v69
  %v144 = vpop.permute.xlu0 %143
  %147 = vset.pattern.permute.xlu0 0
  %148 = vperm.xlu0 %147, %v70
  %v149 = vpop.permute.xlu0 %148
  %v151 = vmul.f32 %v39, %v74
  %v152 = vmul.f32 %v40, %v79
  %v153 = vmul.f32 %v41, %v84
  %v154 = vmul.f32 %v42, %v89
  %v155 = vmul.f32 %v43, %v94
  %v156 = vmul.f32 %v44, %v99
  %v157 = vmul.f32 %v45, %v104
  %v158 = vmul.f32 %v46, %v109
  %v159 = vmul.f32 %v47, %v114
  %v160 = vmul.f32 %v48, %v119
  %v161 = vmul.f32 %v49, %v124
  %v162 = vmul.f32 %v50, %v129
  %v163 = vmul.f32 %v51, %v134
  %v164 = vmul.f32 %v52, %v139
  %v165 = vmul.f32 %v53, %v144
  %v166 = vmul.f32 %v54, %v149
  %v167 = vld [vmem:[%s2] sm:$0xff]
  %v168 = vld [vmem:[%s2 + $0x8] sm:$0xff]
  %v169 = vld [vmem:[%s2 + $0x10] sm:$0xff]
  %v170 = vld [vmem:[%s2 + $0x18] sm:$0xff]
  %v171 = vld [vmem:[%s2 + $0x20] sm:$0xff]
  %v172 = vld [vmem:[%s2 + $0x28] sm:$0xff]
  %v173 = vld [vmem:[%s2 + $0x30] sm:$0xff]
  %v174 = vld [vmem:[%s2 + $0x38] sm:$0xff]
  %v175 = vld [vmem:[%s2 + $0x40] sm:$0xff]
  %v176 = vld [vmem:[%s2 + $0x48] sm:$0xff]
  %v177 = vld [vmem:[%s2 + $0x50] sm:$0xff]
  %v178 = vld [vmem:[%s2 + $0x58] sm:$0xff]
  %v179 = vld [vmem:[%s2 + $0x60] sm:$0xff]
  %v180 = vld [vmem:[%s2 + $0x68] sm:$0xff]
  %v181 = vld [vmem:[%s2 + $0x70] sm:$0xff]
  %v182 = vld [vmem:[%s2 + $0x78] sm:$0xff]
  %v183 = vlaneseq
  %v184 = vand.u32 %v183, 127
  %185 = vset.pattern.permute.xlu0 0
  %186 = vperm.xlu0 %185, %v167
  %v187 = vpop.permute.xlu0 %186
  %188 = vset.pattern.permute.xlu0 0
  %189 = vperm.xlu0 %188, %v168
  %v190 = vpop.permute.xlu0 %189
  %191 = vset.pattern.permute.xlu0 0
  %192 = vperm.xlu0 %191, %v169
  %v193 = vpop.permute.xlu0 %192
  %194 = vset.pattern.permute.xlu0 0
  %195 = vperm.xlu0 %194, %v170
  %v196 = vpop.permute.xlu0 %195
  %197 = vset.pattern.permute.xlu0 0
  %198 = vperm.xlu0 %197, %v171
  %v199 = vpop.permute.xlu0 %198
  %200 = vset.pattern.permute.xlu0 0
  %201 = vperm.xlu0 %200, %v172
  %v202 = vpop.permute.xlu0 %201
  %203 = vset.pattern.permute.xlu0 0
  %204 = vperm.xlu0 %203, %v173
  %v205 = vpop.permute.xlu0 %204
  %206 = vset.pattern.permute.xlu0 0
  %207 = vperm.xlu0 %206, %v174
  %v208 = vpop.permute.xlu0 %207
  %209 = vset.pattern.permute.xlu0 0
  %210 = vperm.xlu0 %209, %v175
  %v211 = vpop.permute.xlu0 %210
  %212 = vset.pattern.permute.xlu0 0
  %213 = vperm.xlu0 %212, %v176
  %v214 = vpop.permute.xlu0 %213
  %215 = vset.pattern.permute.xlu0 0
  %216 = vperm.xlu0 %215, %v177
  %v217 = vpop.permute.xlu0 %216
  %218 = vset.pattern.permute.xlu0 0
  %219 = vperm.xlu0 %218, %v178
  %v220 = vpop.permute.xlu0 %219
  %221 = vset.pattern.permute.xlu0 0
  %222 = vperm.xlu0 %221, %v179
  %v223 = vpop.permute.xlu0 %222
  %224 = vset.pattern.permute.xlu0 0
  %225 = vperm.xlu0 %224, %v180
  %v226 = vpop.permute.xlu0 %225
  %227 = vset.pattern.permute.xlu0 0
  %228 = vperm.xlu0 %227, %v181
  %v229 = vpop.permute.xlu0 %228
  %230 = vset.pattern.permute.xlu0 0
  %231 = vperm.xlu0 %230, %v182
  %v232 = vpop.permute.xlu0 %231
  %vm233 = vcmp.eq.s32.totalorder %v187, %v184
  %vm234 = vcmp.eq.s32.totalorder %v190, %v184
  %vm235 = vcmp.eq.s32.totalorder %v193, %v184
  %vm236 = vcmp.eq.s32.totalorder %v196, %v184
  %vm237 = vcmp.eq.s32.totalorder %v199, %v184
  %vm238 = vcmp.eq.s32.totalorder %v202, %v184
  %vm239 = vcmp.eq.s32.totalorder %v205, %v184
  %vm240 = vcmp.eq.s32.totalorder %v208, %v184
  %vm241 = vcmp.eq.s32.totalorder %v211, %v184
  %vm242 = vcmp.eq.s32.totalorder %v214, %v184
  %vm243 = vcmp.eq.s32.totalorder %v217, %v184
  %vm244 = vcmp.eq.s32.totalorder %v220, %v184
  %vm245 = vcmp.eq.s32.totalorder %v223, %v184
  %vm246 = vcmp.eq.s32.totalorder %v226, %v184
  %vm247 = vcmp.eq.s32.totalorder %v229, %v184
  %vm248 = vcmp.eq.s32.totalorder %v232, %v184
  %v249 = vsel %vm233, 1, 0
  %v250 = vsel %vm234, 1, 0
  %v251 = vsel %vm235, 1, 0
  %v252 = vsel %vm236, 1, 0
  %v253 = vsel %vm237, 1, 0
  %v254 = vsel %vm238, 1, 0
  %v255 = vsel %vm239, 1, 0
  %v256 = vsel %vm240, 1, 0
  %v257 = vsel %vm241, 1, 0
  %v258 = vsel %vm242, 1, 0
  %v259 = vsel %vm243, 1, 0
  %v260 = vsel %vm244, 1, 0
  %v261 = vsel %vm245, 1, 0
  %v262 = vsel %vm246, 1, 0
  %v263 = vsel %vm247, 1, 0
  %v264 = vsel %vm248, 1, 0
  %v265 = vcvt.s32.f32 %v249
  %v266 = vcvt.s32.f32 %v250
  %v267 = vcvt.s32.f32 %v251
  %v268 = vcvt.s32.f32 %v252
  %v269 = vcvt.s32.f32 %v253
  %v270 = vcvt.s32.f32 %v254
  %v271 = vcvt.s32.f32 %v255
  %v272 = vcvt.s32.f32 %v256
  %v273 = vcvt.s32.f32 %v257
  %v274 = vcvt.s32.f32 %v258
  %v275 = vcvt.s32.f32 %v259
  %v276 = vcvt.s32.f32 %v260
  %v277 = vcvt.s32.f32 %v261
  %v278 = vcvt.s32.f32 %v262
  %v279 = vcvt.s32.f32 %v263
  %v280 = vcvt.s32.f32 %v264
  %v281 = vld [vmem:[#allocation3] sm:$0xff]
  %282 = vxpose.xlu0.b32.start [1/16] %v265, 128
  %283 = vxpose.xlu0.b32.cont [2/16] %v266, 128
  %284 = vxpose.xlu0.b32.cont [3/16] %v267, 128
  %285 = vxpose.xlu0.b32.cont [4/16] %v268, 128
  %286 = vxpose.xlu0.b32.cont [5/16] %v269, 128
  %287 = vxpose.xlu0.b32.cont [6/16] %v270, 128
  %288 = vxpose.xlu0.b32.cont [7/16] %v271, 128
  %289 = vxpose.xlu0.b32.cont [8/16] %v272, 128
  %290 = vxpose.xlu0.b32.cont [9/16] %v273, 128
  %291 = vxpose.xlu0.b32.cont [10/16] %v274, 128
  %292 = vxpose.xlu0.b32.cont [11/16] %v275, 128
  %293 = vxpose.xlu0.b32.cont [12/16] %v276, 128
  %294 = vxpose.xlu0.b32.cont [13/16] %v277, 128
  %295 = vxpose.xlu0.b32.cont [14/16] %v278, 128
  %296 = vxpose.xlu0.b32.cont [15/16] %v279, 128
  %297 = vxpose.xlu0.b32.end [16/16] %v280, 128
  %v298 = vpop.trf.xlu0
  %v299 = vpop.trf.xlu0
  %v300 = vpop.trf.xlu0
  %v301 = vpop.trf.xlu0
  %v302 = vpop.trf.xlu0
  %v303 = vpop.trf.xlu0
  %v304 = vpop.trf.xlu0
  %v305 = vpop.trf.xlu0
  %v306 = vpop.trf.xlu0
  %v307 = vpop.trf.xlu0
  %v308 = vpop.trf.xlu0
  %v309 = vpop.trf.xlu0
  %v310 = vpop.trf.xlu0
  %v311 = vpop.trf.xlu0
  %v312 = vpop.trf.xlu0
  %v313 = vpop.trf.xlu0
  %314 = vmatprep.subr.mxu0 0.0
  %315 = vmatpush1.msra.mxu0 %v151
  %316 = vmatprep.subr.mxu0 0.0
  %317 = vmatpush1.msra.mxu0 %v152
  %318 = vmatprep.subr.mxu0 0.0
  %319 = vmatpush1.msra.mxu0 %v153
  %320 = vmatprep.subr.mxu0 0.0
  %321 = vmatpush1.msra.mxu0 %v154
  %322 = vmatprep.subr.mxu0 0.0
  %323 = vmatpush1.msra.mxu0 %v155
  %324 = vmatprep.subr.mxu0 0.0
  %325 = vmatpush1.msra.mxu0 %v156
  %326 = vmatprep.subr.mxu0 0.0
  %327 = vmatpush1.msra.mxu0 %v157
  %328 = vmatprep.subr.mxu0 0.0
  %329 = vmatpush1.msra.mxu0 %v158
  %330 = vmatprep.subr.mxu0 0.0
  %331 = vmatpush1.msra.mxu0 %v159
  %332 = vmatprep.subr.mxu0 0.0
  %333 = vmatpush1.msra.mxu0 %v160
  %334 = vmatprep.subr.mxu0 0.0
  %335 = vmatpush1.msra.mxu0 %v161
  %336 = vmatprep.subr.mxu0 0.0
  %337 = vmatpush1.msra.mxu0 %v162
  %338 = vmatprep.subr.mxu0 0.0
  %339 = vmatpush1.msra.mxu0 %v163
  %340 = vmatprep.subr.mxu0 0.0
  %341 = vmatpush1.msra.mxu0 %v164
  %342 = vmatprep.subr.mxu0 0.0
  %343 = vmatpush1.msra.mxu0 %v165
  %344 = vmatprep.subr.mxu0 0.0
  %345 = vmatpush1.msra.mxu0 %v166
  %346 = vmatprep.subr.mxu0 0.0
  %347 = vmatpush1.msra.mxu0 0.0
  %348 = vmatprep.subr.mxu0 0.0
  %349 = vmatpush1.msra.mxu0 0.0
  %350 = vmatprep.subr.mxu0 0.0
  %351 = vmatpush1.msra.mxu0 0.0
  %352 = vmatprep.subr.mxu0 0.0
  %353 = vmatpush1.msra.mxu0 0.0
  %354 = vmatprep.subr.mxu0 0.0
  %355 = vmatpush1.msra.mxu0 0.0
  %356 = vmatprep.subr.mxu0 0.0
  %357 = vmatpush1.msra.mxu0 0.0
  %358 = vmatprep.subr.mxu0 0.0
  %359 = vmatpush1.msra.mxu0 0.0
  %360 = vmatprep.subr.mxu0 0.0
  %361 = vmatpush1.msra.mxu0 0.0
  %362 = vmatprep.subr.mxu0 0.0
  %363 = vmatpush1.msra.mxu0 0.0
  %364 = vmatprep.subr.mxu0 0.0
  %365 = vmatpush1.msra.mxu0 0.0
  %366 = vmatprep.subr.mxu0 0.0
  %367 = vmatpush1.msra.mxu0 0.0
  %368 = vmatprep.subr.mxu0 0.0
  %369 = vmatpush1.msra.mxu0 0.0
  %370 = vmatprep.subr.mxu0 0.0
  %371 = vmatpush1.msra.mxu0 0.0
  %372 = vmatprep.subr.mxu0 0.0
  %373 = vmatpush1.msra.mxu0 0.0
  %374 = vmatprep.subr.mxu0 0.0
  %375 = vmatpush1.msra.mxu0 0.0
  %376 = vmatprep.subr.mxu0 0.0
  %377 = vmatpush1.msra.mxu0 0.0
  %378 = vmatprep.mubr.f32.mxu0 0.0
  %379 = vmatmul.mubr.f32.gmra.mrb[0].mxu0 %v298
  %v380 = vpop.f32.mrb[0].mxu0
  %v381 = vadd.f32 0.0, %v380
  %v382 = vpop.f32.mrb[0].mxu0
  %383 = vdwg.mxu0
  %v384 = vadd.f32 %v281, %v381
  %385 = vst [vmem:[#allocation3] sm:$0xff] %v384
  %vm386 = vcmp.gt.f32.partialorder %v265, 0.0
  %vm387 = vcmp.gt.f32.partialorder %v266, 0.0
  %vm388 = vcmp.gt.f32.partialorder %v267, 0.0
  %vm389 = vcmp.gt.f32.partialorder %v268, 0.0
  %vm390 = vcmp.gt.f32.partialorder %v269, 0.0
  %vm391 = vcmp.gt.f32.partialorder %v270, 0.0
  %vm392 = vcmp.gt.f32.partialorder %v271, 0.0
  %vm393 = vcmp.gt.f32.partialorder %v272, 0.0
  %vm394 = vcmp.gt.f32.partialorder %v273, 0.0
  %vm395 = vcmp.gt.f32.partialorder %v274, 0.0
  %vm396 = vcmp.gt.f32.partialorder %v275, 0.0
  %vm397 = vcmp.gt.f32.partialorder %v276, 0.0
  %vm398 = vcmp.gt.f32.partialorder %v277, 0.0
  %vm399 = vcmp.gt.f32.partialorder %v278, 0.0
  %vm400 = vcmp.gt.f32.partialorder %v279, 0.0
  %vm401 = vcmp.gt.f32.partialorder %v280, 0.0
  %v402 = vsel %vm386, 1, 0
  %v403 = vsel %vm387, 1, 0
  %v404 = vsel %vm388, 1, 0
  %v405 = vsel %vm389, 1, 0
  %v406 = vsel %vm390, 1, 0
  %v407 = vsel %vm391, 1, 0
  %v408 = vsel %vm392, 1, 0
  %v409 = vsel %vm393, 1, 0
  %v410 = vsel %vm394, 1, 0
  %v411 = vsel %vm395, 1, 0
  %v412 = vsel %vm396, 1, 0
  %v413 = vsel %vm397, 1, 0
  %v414 = vsel %vm398, 1, 0
  %v415 = vsel %vm399, 1, 0
  %v416 = vsel %vm400, 1, 0
  %v417 = vsel %vm401, 1, 0
  %418 = vset.pattern.permute.xlu0 0
  %419 = vperm.xlu0 %418, %v402
  %v420 = vpop.permute.xlu0 %419
  %421 = vset.pattern.permute.xlu0 0
  %422 = vperm.xlu0 %421, %v403
  %v423 = vpop.permute.xlu0 %422
  %424 = vset.pattern.permute.xlu0 0
  %425 = vperm.xlu0 %424, %v404
  %v426 = vpop.permute.xlu0 %425
  %427 = vset.pattern.permute.xlu0 0
  %428 = vperm.xlu0 %427, %v405
  %v429 = vpop.permute.xlu0 %428
  %430 = vset.pattern.permute.xlu0 0
  %431 = vperm.xlu0 %430, %v406
  %v432 = vpop.permute.xlu0 %431
  %433 = vset.pattern.permute.xlu0 0
  %434 = vperm.xlu0 %433, %v407
  %v435 = vpop.permute.xlu0 %434
  %436 = vset.pattern.permute.xlu0 0
  %437 = vperm.xlu0 %436, %v408
  %v438 = vpop.permute.xlu0 %437
  %439 = vset.pattern.permute.xlu0 0
  %440 = vperm.xlu0 %439, %v409
  %v441 = vpop.permute.xlu0 %440
  %442 = vset.pattern.permute.xlu0 0
  %443 = vperm.xlu0 %442, %v410
  %v444 = vpop.permute.xlu0 %443
  %445 = vset.pattern.permute.xlu0 0
  %446 = vperm.xlu0 %445, %v411
  %v447 = vpop.permute.xlu0 %446
  %448 = vset.pattern.permute.xlu0 0
  %449 = vperm.xlu0 %448, %v412
  %v450 = vpop.permute.xlu0 %449
  %451 = vset.pattern.permute.xlu0 0
  %452 = vperm.xlu0 %451, %v413
  %v453 = vpop.permute.xlu0 %452
  %454 = vset.pattern.permute.xlu0 0
  %455 = vperm.xlu0 %454, %v414
  %v456 = vpop.permute.xlu0 %455
  %457 = vset.pattern.permute.xlu0 0
  %458 = vperm.xlu0 %457, %v415
  %v459 = vpop.permute.xlu0 %458
  %460 = vset.pattern.permute.xlu0 0
  %461 = vperm.xlu0 %460, %v416
  %v462 = vpop.permute.xlu0 %461
  %463 = vset.pattern.permute.xlu0 0
  %464 = vperm.xlu0 %463, %v417
  %v465 = vpop.permute.xlu0 %464
  %vm466 = vcmp.eq.s32.totalorder %v420, 1
  %vm467 = vcmp.eq.s32.totalorder %v423, 1
  %vm468 = vcmp.eq.s32.totalorder %v426, 1
  %vm469 = vcmp.eq.s32.totalorder %v429, 1
  %vm470 = vcmp.eq.s32.totalorder %v432, 1
  %vm471 = vcmp.eq.s32.totalorder %v435, 1
  %vm472 = vcmp.eq.s32.totalorder %v438, 1
  %vm473 = vcmp.eq.s32.totalorder %v441, 1
  %vm474 = vcmp.eq.s32.totalorder %v444, 1
  %vm475 = vcmp.eq.s32.totalorder %v447, 1
  %vm476 = vcmp.eq.s32.totalorder %v450, 1
  %vm477 = vcmp.eq.s32.totalorder %v453, 1
  %vm478 = vcmp.eq.s32.totalorder %v456, 1
  %vm479 = vcmp.eq.s32.totalorder %v459, 1
  %vm480 = vcmp.eq.s32.totalorder %v462, 1
  %vm481 = vcmp.eq.s32.totalorder %v465, 1
  %v482 = vsel %vm466, %v151, -3e+38
  %v483 = vsel %vm467, %v152, -3e+38
  %v484 = vsel %vm468, %v153, -3e+38
  %v485 = vsel %vm469, %v154, -3e+38
  %v486 = vsel %vm470, %v155, -3e+38
  %v487 = vsel %vm471, %v156, -3e+38
  %v488 = vsel %vm472, %v157, -3e+38
  %v489 = vsel %vm473, %v158, -3e+38
  %v490 = vsel %vm474, %v159, -3e+38
  %v491 = vsel %vm475, %v160, -3e+38
  %v492 = vsel %vm476, %v161, -3e+38
  %v493 = vsel %vm477, %v162, -3e+38
  %v494 = vsel %vm478, %v163, -3e+38
  %v495 = vsel %vm479, %v164, -3e+38
  %v496 = vsel %vm480, %v165, -3e+38
  %v497 = vsel %vm481, %v166, -3e+38
  %v498 = vmax.f32 %v482, %v486
  %v499 = vmax.f32 %v483, %v487
  %v500 = vmax.f32 %v484, %v488
  %v501 = vmax.f32 %v485, %v489
  %v502 = vmax.f32 %v498, %v490
  %v503 = vmax.f32 %v499, %v491
  %v504 = vmax.f32 %v500, %v492
  %v505 = vmax.f32 %v501, %v493
  %v506 = vmax.f32 %v502, %v494
  %v507 = vmax.f32 %v503, %v495
  %v508 = vmax.f32 %v504, %v496
  %v509 = vmax.f32 %v505, %v497
  %v510 = vmax.f32 %v506, %v507
  %v511 = vmax.f32 %v508, %v509
  %v512 = vmax.f32 %v510, %v511
  %v513 = vrot.slane %v512, 4
  %v514 = vmax.f32 %v512, %v513
  %v515 = vrot.slane %v514, 2
  %v516 = vmax.f32 %v514, %v515
  %v517 = vrot.slane %v516, 1
  %v518 = vmax.f32 %v516, %v517
  %519 = vset.pattern.permute.xlu0 1
  %520 = vperm.xlu0 %519, %v402
  %v521 = vpop.permute.xlu0 %520
  %522 = vset.pattern.permute.xlu0 1
  %523 = vperm.xlu0 %522, %v403
  %v524 = vpop.permute.xlu0 %523
  %525 = vset.pattern.permute.xlu0 1
  %526 = vperm.xlu0 %525, %v404
  %v527 = vpop.permute.xlu0 %526
  %528 = vset.pattern.permute.xlu0 1
  %529 = vperm.xlu0 %528, %v405
  %v530 = vpop.permute.xlu0 %529
  %531 = vset.pattern.permute.xlu0 1
  %532 = vperm.xlu0 %531, %v406
  %v533 = vpop.permute.xlu0 %532
  %534 = vset.pattern.permute.xlu0 1
  %535 = vperm.xlu0 %534, %v407
  %v536 = vpop.permute.xlu0 %535
  %537 = vset.pattern.permute.xlu0 1
  %538 = vperm.xlu0 %537, %v408
  %v539 = vpop.permute.xlu0 %538
  %540 = vset.pattern.permute.xlu0 1
  %541 = vperm.xlu0 %540, %v409
  %v542 = vpop.permute.xlu0 %541
  %543 = vset.pattern.permute.xlu0 1
  %544 = vperm.xlu0 %543, %v410
  %v545 = vpop.permute.xlu0 %544
  %546 = vset.pattern.permute.xlu0 1
  %547 = vperm.xlu0 %546, %v411
  %v548 = vpop.permute.xlu0 %547
  %549 = vset.pattern.permute.xlu0 1
  %550 = vperm.xlu0 %549, %v412
  %v551 = vpop.permute.xlu0 %550
  %552 = vset.pattern.permute.xlu0 1
  %553 = vperm.xlu0 %552, %v413
  %v554 = vpop.permute.xlu0 %553
  %555 = vset.pattern.permute.xlu0 1
  %556 = vperm.xlu0 %555, %v414
  %v557 = vpop.permute.xlu0 %556
  %558 = vset.pattern.permute.xlu0 1
  %559 = vperm.xlu0 %558, %v415
  %v560 = vpop.permute.xlu0 %559
  %561 = vset.pattern.permute.xlu0 1
  %562 = vperm.xlu0 %561, %v416
  %v563 = vpop.permute.xlu0 %562
  %564 = vset.pattern.permute.xlu0 1
  %565 = vperm.xlu0 %564, %v417
  %v566 = vpop.permute.xlu0 %565
  %vm567 = vcmp.eq.s32.totalorder %v521, 1
  %vm568 = vcmp.eq.s32.totalorder %v524, 1
  %vm569 = vcmp.eq.s32.totalorder %v527, 1
  %vm570 = vcmp.eq.s32.totalorder %v530, 1
  %vm571 = vcmp.eq.s32.totalorder %v533, 1
  %vm572 = vcmp.eq.s32.totalorder %v536, 1
  %vm573 = vcmp.eq.s32.totalorder %v539, 1
  %vm574 = vcmp.eq.s32.totalorder %v542, 1
  %vm575 = vcmp.eq.s32.totalorder %v545, 1
  %vm576 = vcmp.eq.s32.totalorder %v548, 1
  %vm577 = vcmp.eq.s32.totalorder %v551, 1
  %vm578 = vcmp.eq.s32.totalorder %v554, 1
  %vm579 = vcmp.eq.s32.totalorder %v557, 1
  %vm580 = vcmp.eq.s32.totalorder %v560, 1
  %vm581 = vcmp.eq.s32.totalorder %v563, 1
  %vm582 = vcmp.eq.s32.totalorder %v566, 1
  %v583 = vsel %vm567, %v151, -3e+38
  %v584 = vsel %vm568, %v152, -3e+38
  %v585 = vsel %vm569, %v153, -3e+38
  %v586 = vsel %vm570, %v154, -3e+38
  %v587 = vsel %vm571, %v155, -3e+38
  %v588 = vsel %vm572, %v156, -3e+38
  %v589 = vsel %vm573, %v157, -3e+38
  %v590 = vsel %vm574, %v158, -3e+38
  %v591 = vsel %vm575, %v159, -3e+38
  %v592 = vsel %vm576, %v160, -3e+38
  %v593 = vsel %vm577, %v161, -3e+38
  %v594 = vsel %vm578, %v162, -3e+38
  %v595 = vsel %vm579, %v163, -3e+38
  %v596 = vsel %vm580, %v164, -3e+38
  %v597 = vsel %vm581, %v165, -3e+38
  %v598 = vsel %vm582, %v166, -3e+38
  %v599 = vmax.f32 %v583, %v587
  %v600 = vmax.f32 %v584, %v588
  %v601 = vmax.f32 %v585, %v589
  %v602 = vmax.f32 %v586, %v590
  %v603 = vmax.f32 %v599, %v591
  %v604 = vmax.f32 %v600, %v592
  %v605 = vmax.f32 %v601, %v593
  %v606 = vmax.f32 %v602, %v594
  %v607 = vmax.f32 %v603, %v595
  %v608 = vmax.f32 %v604, %v596
  %v609 = vmax.f32 %v605, %v597
  %v610 = vmax.f32 %v606, %v598
  %v611 = vmax.f32 %v607, %v608
  %v612 = vmax.f32 %v609, %v610
  %v613 = vmax.f32 %v611, %v612
  %v614 = vrot.slane %v613, 4
  %v615 = vmax.f32 %v613, %v614
  %v616 = vrot.slane %v615, 2
  %v617 = vmax.f32 %v615, %v616
  %v618 = vrot.slane %v617, 1
  %v619 = vmax.f32 %v617, %v618
  %620 = vset.pattern.permute.xlu0 2
  %621 = vperm.xlu0 %620, %v402
  %v622 = vpop.permute.xlu0 %621
  %623 = vset.pattern.permute.xlu0 2
  %624 = vperm.xlu0 %623, %v403
  %v625 = vpop.permute.xlu0 %624
  %626 = vset.pattern.permute.xlu0 2
  %627 = vperm.xlu0 %626, %v404
  %v628 = vpop.permute.xlu0 %627
  %629 = vset.pattern.permute.xlu0 2
  %630 = vperm.xlu0 %629, %v405
  %v631 = vpop.permute.xlu0 %630
  %632 = vset.pattern.permute.xlu0 2
  %633 = vperm.xlu0 %632, %v406
  %v634 = vpop.permute.xlu0 %633
  %635 = vset.pattern.permute.xlu0 2
  %636 = vperm.xlu0 %635, %v407
  %v637 = vpop.permute.xlu0 %636
  %638 = vset.pattern.permute.xlu0 2
  %639 = vperm.xlu0 %638, %v408
  %v640 = vpop.permute.xlu0 %639
  %641 = vset.pattern.permute.xlu0 2
  %642 = vperm.xlu0 %641, %v409
  %v643 = vpop.permute.xlu0 %642
  %644 = vset.pattern.permute.xlu0 2
  %645 = vperm.xlu0 %644, %v410
  %v646 = vpop.permute.xlu0 %645
  %647 = vset.pattern.permute.xlu0 2
  %648 = vperm.xlu0 %647, %v411
  %v649 = vpop.permute.xlu0 %648
  %650 = vset.pattern.permute.xlu0 2
  %651 = vperm.xlu0 %650, %v412
  %v652 = vpop.permute.xlu0 %651
  %653 = vset.pattern.permute.xlu0 2
  %654 = vperm.xlu0 %653, %v413
  %v655 = vpop.permute.xlu0 %654
  %656 = vset.pattern.permute.xlu0 2
  %657 = vperm.xlu0 %656, %v414
  %v658 = vpop.permute.xlu0 %657
  %659 = vset.pattern.permute.xlu0 2
  %660 = vperm.xlu0 %659, %v415
  %v661 = vpop.permute.xlu0 %660
  %662 = vset.pattern.permute.xlu0 2
  %663 = vperm.xlu0 %662, %v416
  %v664 = vpop.permute.xlu0 %663
  %665 = vset.pattern.permute.xlu0 2
  %666 = vperm.xlu0 %665, %v417
  %v667 = vpop.permute.xlu0 %666
  %vm668 = vcmp.eq.s32.totalorder %v622, 1
  %vm669 = vcmp.eq.s32.totalorder %v625, 1
  %vm670 = vcmp.eq.s32.totalorder %v628, 1
  %vm671 = vcmp.eq.s32.totalorder %v631, 1
  %vm672 = vcmp.eq.s32.totalorder %v634, 1
  %vm673 = vcmp.eq.s32.totalorder %v637, 1
  %vm674 = vcmp.eq.s32.totalorder %v640, 1
  %vm675 = vcmp.eq.s32.totalorder %v643, 1
  %vm676 = vcmp.eq.s32.totalorder %v646, 1
  %vm677 = vcmp.eq.s32.totalorder %v649, 1
  %vm678 = vcmp.eq.s32.totalorder %v652, 1
  %vm679 = vcmp.eq.s32.totalorder %v655, 1
  %vm680 = vcmp.eq.s32.totalorder %v658, 1
  %vm681 = vcmp.eq.s32.totalorder %v661, 1
  %vm682 = vcmp.eq.s32.totalorder %v664, 1
  %vm683 = vcmp.eq.s32.totalorder %v667, 1
  %v684 = vsel %vm668, %v151, -3e+38
  %v685 = vsel %vm669, %v152, -3e+38
  %v686 = vsel %vm670, %v153, -3e+38
  %v687 = vsel %vm671, %v154, -3e+38
  %v688 = vsel %vm672, %v155, -3e+38
  %v689 = vsel %vm673, %v156, -3e+38
  %v690 = vsel %vm674, %v157, -3e+38
  %v691 = vsel %vm675, %v158, -3e+38
  %v692 = vsel %vm676, %v159, -3e+38
  %v693 = vsel %vm677, %v160, -3e+38
  %v694 = vsel %vm678, %v161, -3e+38
  %v695 = vsel %vm679, %v162, -3e+38
  %v696 = vsel %vm680, %v163, -3e+38
  %v697 = vsel %vm681, %v164, -3e+38
  %v698 = vsel %vm682, %v165, -3e+38
  %v699 = vsel %vm683, %v166, -3e+38
  %v700 = vmax.f32 %v684, %v688
  %v701 = vmax.f32 %v685, %v689
  %v702 = vmax.f32 %v686, %v690
  %v703 = vmax.f32 %v687, %v691
  %v704 = vmax.f32 %v700, %v692
  %v705 = vmax.f32 %v701, %v693
  %v706 = vmax.f32 %v702, %v694
  %v707 = vmax.f32 %v703, %v695
  %v708 = vmax.f32 %v704, %v696
  %v709 = vmax.f32 %v705, %v697
  %v710 = vmax.f32 %v706, %v698
  %v711 = vmax.f32 %v707, %v699
  %v712 = vmax.f32 %v708, %v709
  %v713 = vmax.f32 %v710, %v711
  %v714 = vmax.f32 %v712, %v713
  %v715 = vrot.slane %v714, 4
  %v716 = vmax.f32 %v714, %v715
  %v717 = vrot.slane %v716, 2
  %v718 = vmax.f32 %v716, %v717
  %v719 = vrot.slane %v718, 1
  %v720 = vmax.f32 %v718, %v719
  %721 = vset.pattern.permute.xlu0 3
  %722 = vperm.xlu0 %721, %v402
  %v723 = vpop.permute.xlu0 %722
  %724 = vset.pattern.permute.xlu0 3
  %725 = vperm.xlu0 %724, %v403
  %v726 = vpop.permute.xlu0 %725
  %727 = vset.pattern.permute.xlu0 3
  %728 = vperm.xlu0 %727, %v404
  %v729 = vpop.permute.xlu0 %728
  %730 = vset.pattern.permute.xlu0 3
  %731 = vperm.xlu0 %730, %v405
  %v732 = vpop.permute.xlu0 %731
  %733 = vset.pattern.permute.xlu0 3
  %734 = vperm.xlu0 %733, %v406
  %v735 = vpop.permute.xlu0 %734
  %736 = vset.pattern.permute.xlu0 3
  %737 = vperm.xlu0 %736, %v407
  %v738 = vpop.permute.xlu0 %737
  %739 = vset.pattern.permute.xlu0 3
  %740 = vperm.xlu0 %739, %v408
  %v741 = vpop.permute.xlu0 %740
  %742 = vset.pattern.permute.xlu0 3
  %743 = vperm.xlu0 %742, %v409
  %v744 = vpop.permute.xlu0 %743
  %745 = vset.pattern.permute.xlu0 3
  %746 = vperm.xlu0 %745, %v410
  %v747 = vpop.permute.xlu0 %746
  %748 = vset.pattern.permute.xlu0 3
  %749 = vperm.xlu0 %748, %v411
  %v750 = vpop.permute.xlu0 %749
  %751 = vset.pattern.permute.xlu0 3
  %752 = vperm.xlu0 %751, %v412
  %v753 = vpop.permute.xlu0 %752
  %754 = vset.pattern.permute.xlu0 3
  %755 = vperm.xlu0 %754, %v413
  %v756 = vpop.permute.xlu0 %755
  %757 = vset.pattern.permute.xlu0 3
  %758 = vperm.xlu0 %757, %v414
  %v759 = vpop.permute.xlu0 %758
  %760 = vset.pattern.permute.xlu0 3
  %761 = vperm.xlu0 %760, %v415
  %v762 = vpop.permute.xlu0 %761
  %763 = vset.pattern.permute.xlu0 3
  %764 = vperm.xlu0 %763, %v416
  %v765 = vpop.permute.xlu0 %764
  %766 = vset.pattern.permute.xlu0 3
  %767 = vperm.xlu0 %766, %v417
  %v768 = vpop.permute.xlu0 %767
  %vm769 = vcmp.eq.s32.totalorder %v723, 1
  %vm770 = vcmp.eq.s32.totalorder %v726, 1
  %vm771 = vcmp.eq.s32.totalorder %v729, 1
  %vm772 = vcmp.eq.s32.totalorder %v732, 1
  %vm773 = vcmp.eq.s32.totalorder %v735, 1
  %vm774 = vcmp.eq.s32.totalorder %v738, 1
  %vm775 = vcmp.eq.s32.totalorder %v741, 1
  %vm776 = vcmp.eq.s32.totalorder %v744, 1
  %vm777 = vcmp.eq.s32.totalorder %v747, 1
  %vm778 = vcmp.eq.s32.totalorder %v750, 1
  %vm779 = vcmp.eq.s32.totalorder %v753, 1
  %vm780 = vcmp.eq.s32.totalorder %v756, 1
  %vm781 = vcmp.eq.s32.totalorder %v759, 1
  %vm782 = vcmp.eq.s32.totalorder %v762, 1
  %vm783 = vcmp.eq.s32.totalorder %v765, 1
  %vm784 = vcmp.eq.s32.totalorder %v768, 1
  %v785 = vsel %vm769, %v151, -3e+38
  %v786 = vsel %vm770, %v152, -3e+38
  %v787 = vsel %vm771, %v153, -3e+38
  %v788 = vsel %vm772, %v154, -3e+38
  %v789 = vsel %vm773, %v155, -3e+38
  %v790 = vsel %vm774, %v156, -3e+38
  %v791 = vsel %vm775, %v157, -3e+38
  %v792 = vsel %vm776, %v158, -3e+38
  %v793 = vsel %vm777, %v159, -3e+38
  %v794 = vsel %vm778, %v160, -3e+38
  %v795 = vsel %vm779, %v161, -3e+38
  %v796 = vsel %vm780, %v162, -3e+38
  %v797 = vsel %vm781, %v163, -3e+38
  %v798 = vsel %vm782, %v164, -3e+38
  %v799 = vsel %vm783, %v165, -3e+38
  %v800 = vsel %vm784, %v166, -3e+38
  %v801 = vmax.f32 %v785, %v789
  %v802 = vmax.f32 %v786, %v790
  %v803 = vmax.f32 %v787, %v791
  %v804 = vmax.f32 %v788, %v792
  %v805 = vmax.f32 %v801, %v793
  %v806 = vmax.f32 %v802, %v794
  %v807 = vmax.f32 %v803, %v795
  %v808 = vmax.f32 %v804, %v796
  %v809 = vmax.f32 %v805, %v797
  %v810 = vmax.f32 %v806, %v798
  %v811 = vmax.f32 %v807, %v799
  %v812 = vmax.f32 %v808, %v800
  %v813 = vmax.f32 %v809, %v810
  %v814 = vmax.f32 %v811, %v812
  %v815 = vmax.f32 %v813, %v814
  %v816 = vrot.slane %v815, 4
  %v817 = vmax.f32 %v815, %v816
  %v818 = vrot.slane %v817, 2
  %v819 = vmax.f32 %v817, %v818
  %v820 = vrot.slane %v819, 1
  %v821 = vmax.f32 %v819, %v820
  %822 = vset.pattern.permute.xlu0 4
  %823 = vperm.xlu0 %822, %v402
  %v824 = vpop.permute.xlu0 %823
  %825 = vset.pattern.permute.xlu0 4
  %826 = vperm.xlu0 %825, %v403
  %v827 = vpop.permute.xlu0 %826
  %828 = vset.pattern.permute.xlu0 4
  %829 = vperm.xlu0 %828, %v404
  %v830 = vpop.permute.xlu0 %829
  %831 = vset.pattern.permute.xlu0 4
  %832 = vperm.xlu0 %831, %v405
  %v833 = vpop.permute.xlu0 %832
  %834 = vset.pattern.permute.xlu0 4
  %835 = vperm.xlu0 %834, %v406
  %v836 = vpop.permute.xlu0 %835
  %837 = vset.pattern.permute.xlu0 4
  %838 = vperm.xlu0 %837, %v407
  %v839 = vpop.permute.xlu0 %838
  %840 = vset.pattern.permute.xlu0 4
  %841 = vperm.xlu0 %840, %v408
  %v842 = vpop.permute.xlu0 %841
  %843 = vset.pattern.permute.xlu0 4
  %844 = vperm.xlu0 %843, %v409
  %v845 = vpop.permute.xlu0 %844
  %846 = vset.pattern.permute.xlu0 4
  %847 = vperm.xlu0 %846, %v410
  %v848 = vpop.permute.xlu0 %847
  %849 = vset.pattern.permute.xlu0 4
  %850 = vperm.xlu0 %849, %v411
  %v851 = vpop.permute.xlu0 %850
  %852 = vset.pattern.permute.xlu0 4
  %853 = vperm.xlu0 %852, %v412
  %v854 = vpop.permute.xlu0 %853
  %855 = vset.pattern.permute.xlu0 4
  %856 = vperm.xlu0 %855, %v413
  %v857 = vpop.permute.xlu0 %856
  %858 = vset.pattern.permute.xlu0 4
  %859 = vperm.xlu0 %858, %v414
  %v860 = vpop.permute.xlu0 %859
  %861 = vset.pattern.permute.xlu0 4
  %862 = vperm.xlu0 %861, %v415
  %v863 = vpop.permute.xlu0 %862
  %864 = vset.pattern.permute.xlu0 4
  %865 = vperm.xlu0 %864, %v416
  %v866 = vpop.permute.xlu0 %865
  %867 = vset.pattern.permute.xlu0 4
  %868 = vperm.xlu0 %867, %v417
  %v869 = vpop.permute.xlu0 %868
  %vm870 = vcmp.eq.s32.totalorder %v824, 1
  %vm871 = vcmp.eq.s32.totalorder %v827, 1
  %vm872 = vcmp.eq.s32.totalorder %v830, 1
  %vm873 = vcmp.eq.s32.totalorder %v833, 1
  %vm874 = vcmp.eq.s32.totalorder %v836, 1
  %vm875 = vcmp.eq.s32.totalorder %v839, 1
  %vm876 = vcmp.eq.s32.totalorder %v842, 1
  %vm877 = vcmp.eq.s32.totalorder %v845, 1
  %vm878 = vcmp.eq.s32.totalorder %v848, 1
  %vm879 = vcmp.eq.s32.totalorder %v851, 1
  %vm880 = vcmp.eq.s32.totalorder %v854, 1
  %vm881 = vcmp.eq.s32.totalorder %v857, 1
  %vm882 = vcmp.eq.s32.totalorder %v860, 1
  %vm883 = vcmp.eq.s32.totalorder %v863, 1
  %vm884 = vcmp.eq.s32.totalorder %v866, 1
  %vm885 = vcmp.eq.s32.totalorder %v869, 1
  %v886 = vsel %vm870, %v151, -3e+38
  %v887 = vsel %vm871, %v152, -3e+38
  %v888 = vsel %vm872, %v153, -3e+38
  %v889 = vsel %vm873, %v154, -3e+38
  %v890 = vsel %vm874, %v155, -3e+38
  %v891 = vsel %vm875, %v156, -3e+38
  %v892 = vsel %vm876, %v157, -3e+38
  %v893 = vsel %vm877, %v158, -3e+38
  %v894 = vsel %vm878, %v159, -3e+38
  %v895 = vsel %vm879, %v160, -3e+38
  %v896 = vsel %vm880, %v161, -3e+38
  %v897 = vsel %vm881, %v162, -3e+38
  %v898 = vsel %vm882, %v163, -3e+38
  %v899 = vsel %vm883, %v164, -3e+38
  %v900 = vsel %vm884, %v165, -3e+38
  %v901 = vsel %vm885, %v166, -3e+38
  %v902 = vmax.f32 %v886, %v890
  %v903 = vmax.f32 %v887, %v891
  %v904 = vmax.f32 %v888, %v892
  %v905 = vmax.f32 %v889, %v893
  %v906 = vmax.f32 %v902, %v894
  %v907 = vmax.f32 %v903, %v895
  %v908 = vmax.f32 %v904, %v896
  %v909 = vmax.f32 %v905, %v897
  %v910 = vmax.f32 %v906, %v898
  %v911 = vmax.f32 %v907, %v899
  %v912 = vmax.f32 %v908, %v900
  %v913 = vmax.f32 %v909, %v901
  %v914 = vmax.f32 %v910, %v911
  %v915 = vmax.f32 %v912, %v913
  %v916 = vmax.f32 %v914, %v915
  %v917 = vrot.slane %v916, 4
  %v918 = vmax.f32 %v916, %v917
  %v919 = vrot.slane %v918, 2
  %v920 = vmax.f32 %v918, %v919
  %v921 = vrot.slane %v920, 1
  %v922 = vmax.f32 %v920, %v921
  %923 = vset.pattern.permute.xlu0 5
  %924 = vperm.xlu0 %923, %v402
  %v925 = vpop.permute.xlu0 %924
  %926 = vset.pattern.permute.xlu0 5
  %927 = vperm.xlu0 %926, %v403
  %v928 = vpop.permute.xlu0 %927
  %929 = vset.pattern.permute.xlu0 5
  %930 = vperm.xlu0 %929, %v404
  %v931 = vpop.permute.xlu0 %930
  %932 = vset.pattern.permute.xlu0 5
  %933 = vperm.xlu0 %932, %v405
  %v934 = vpop.permute.xlu0 %933
  %935 = vset.pattern.permute.xlu0 5
  %936 = vperm.xlu0 %935, %v406
  %v937 = vpop.permute.xlu0 %936
  %938 = vset.pattern.permute.xlu0 5
  %939 = vperm.xlu0 %938, %v407
  %v940 = vpop.permute.xlu0 %939
  %941 = vset.pattern.permute.xlu0 5
  %942 = vperm.xlu0 %941, %v408
  %v943 = vpop.permute.xlu0 %942
  %944 = vset.pattern.permute.xlu0 5
  %945 = vperm.xlu0 %944, %v409
  %v946 = vpop.permute.xlu0 %945
  %947 = vset.pattern.permute.xlu0 5
  %948 = vperm.xlu0 %947, %v410
  %v949 = vpop.permute.xlu0 %948
  %950 = vset.pattern.permute.xlu0 5
  %951 = vperm.xlu0 %950, %v411
  %v952 = vpop.permute.xlu0 %951
  %953 = vset.pattern.permute.xlu0 5
  %954 = vperm.xlu0 %953, %v412
  %v955 = vpop.permute.xlu0 %954
  %956 = vset.pattern.permute.xlu0 5
  %957 = vperm.xlu0 %956, %v413
  %v958 = vpop.permute.xlu0 %957
  %959 = vset.pattern.permute.xlu0 5
  %960 = vperm.xlu0 %959, %v414
  %v961 = vpop.permute.xlu0 %960
  %962 = vset.pattern.permute.xlu0 5
  %963 = vperm.xlu0 %962, %v415
  %v964 = vpop.permute.xlu0 %963
  %965 = vset.pattern.permute.xlu0 5
  %966 = vperm.xlu0 %965, %v416
  %v967 = vpop.permute.xlu0 %966
  %968 = vset.pattern.permute.xlu0 5
  %969 = vperm.xlu0 %968, %v417
  %v970 = vpop.permute.xlu0 %969
  %vm971 = vcmp.eq.s32.totalorder %v925, 1
  %vm972 = vcmp.eq.s32.totalorder %v928, 1
  %vm973 = vcmp.eq.s32.totalorder %v931, 1
  %vm974 = vcmp.eq.s32.totalorder %v934, 1
  %vm975 = vcmp.eq.s32.totalorder %v937, 1
  %vm976 = vcmp.eq.s32.totalorder %v940, 1
  %vm977 = vcmp.eq.s32.totalorder %v943, 1
  %vm978 = vcmp.eq.s32.totalorder %v946, 1
  %vm979 = vcmp.eq.s32.totalorder %v949, 1
  %vm980 = vcmp.eq.s32.totalorder %v952, 1
  %vm981 = vcmp.eq.s32.totalorder %v955, 1
  %vm982 = vcmp.eq.s32.totalorder %v958, 1
  %vm983 = vcmp.eq.s32.totalorder %v961, 1
  %vm984 = vcmp.eq.s32.totalorder %v964, 1
  %vm985 = vcmp.eq.s32.totalorder %v967, 1
  %vm986 = vcmp.eq.s32.totalorder %v970, 1
  %v987 = vsel %vm971, %v151, -3e+38
  %v988 = vsel %vm972, %v152, -3e+38
  %v989 = vsel %vm973, %v153, -3e+38
  %v990 = vsel %vm974, %v154, -3e+38
  %v991 = vsel %vm975, %v155, -3e+38
  %v992 = vsel %vm976, %v156, -3e+38
  %v993 = vsel %vm977, %v157, -3e+38
  %v994 = vsel %vm978, %v158, -3e+38
  %v995 = vsel %vm979, %v159, -3e+38
  %v996 = vsel %vm980, %v160, -3e+38
  %v997 = vsel %vm981, %v161, -3e+38
  %v998 = vsel %vm982, %v162, -3e+38
  %v999 = vsel %vm983, %v163, -3e+38
  %v1000 = vsel %vm984, %v164, -3e+38
  %v1001 = vsel %vm985, %v165, -3e+38
  %v1002 = vsel %vm986, %v166, -3e+38
  %v1003 = vmax.f32 %v987, %v991
  %v1004 = vmax.f32 %v988, %v992
  %v1005 = vmax.f32 %v989, %v993
  %v1006 = vmax.f32 %v990, %v994
  %v1007 = vmax.f32 %v1003, %v995
  %v1008 = vmax.f32 %v1004, %v996
  %v1009 = vmax.f32 %v1005, %v997
  %v1010 = vmax.f32 %v1006, %v998
  %v1011 = vmax.f32 %v1007, %v999
  %v1012 = vmax.f32 %v1008, %v1000
  %v1013 = vmax.f32 %v1009, %v1001
  %v1014 = vmax.f32 %v1010, %v1002
  %v1015 = vmax.f32 %v1011, %v1012
  %v1016 = vmax.f32 %v1013, %v1014
  %v1017 = vmax.f32 %v1015, %v1016
  %v1018 = vrot.slane %v1017, 4
  %v1019 = vmax.f32 %v1017, %v1018
  %v1020 = vrot.slane %v1019, 2
  %v1021 = vmax.f32 %v1019, %v1020
  %v1022 = vrot.slane %v1021, 1
  %v1023 = vmax.f32 %v1021, %v1022
  %1024 = vset.pattern.permute.xlu0 6
  %1025 = vperm.xlu0 %1024, %v402
  %v1026 = vpop.permute.xlu0 %1025
  %1027 = vset.pattern.permute.xlu0 6
  %1028 = vperm.xlu0 %1027, %v403
  %v1029 = vpop.permute.xlu0 %1028
  %1030 = vset.pattern.permute.xlu0 6
  %1031 = vperm.xlu0 %1030, %v404
  %v1032 = vpop.permute.xlu0 %1031
  %1033 = vset.pattern.permute.xlu0 6
  %1034 = vperm.xlu0 %1033, %v405
  %v1035 = vpop.permute.xlu0 %1034
  %1036 = vset.pattern.permute.xlu0 6
  %1037 = vperm.xlu0 %1036, %v406
  %v1038 = vpop.permute.xlu0 %1037
  %1039 = vset.pattern.permute.xlu0 6
  %1040 = vperm.xlu0 %1039, %v407
  %v1041 = vpop.permute.xlu0 %1040
  %1042 = vset.pattern.permute.xlu0 6
  %1043 = vperm.xlu0 %1042, %v408
  %v1044 = vpop.permute.xlu0 %1043
  %1045 = vset.pattern.permute.xlu0 6
  %1046 = vperm.xlu0 %1045, %v409
  %v1047 = vpop.permute.xlu0 %1046
  %1048 = vset.pattern.permute.xlu0 6
  %1049 = vperm.xlu0 %1048, %v410
  %v1050 = vpop.permute.xlu0 %1049
  %1051 = vset.pattern.permute.xlu0 6
  %1052 = vperm.xlu0 %1051, %v411
  %v1053 = vpop.permute.xlu0 %1052
  %1054 = vset.pattern.permute.xlu0 6
  %1055 = vperm.xlu0 %1054, %v412
  %v1056 = vpop.permute.xlu0 %1055
  %1057 = vset.pattern.permute.xlu0 6
  %1058 = vperm.xlu0 %1057, %v413
  %v1059 = vpop.permute.xlu0 %1058
  %1060 = vset.pattern.permute.xlu0 6
  %1061 = vperm.xlu0 %1060, %v414
  %v1062 = vpop.permute.xlu0 %1061
  %1063 = vset.pattern.permute.xlu0 6
  %1064 = vperm.xlu0 %1063, %v415
  %v1065 = vpop.permute.xlu0 %1064
  %1066 = vset.pattern.permute.xlu0 6
  %1067 = vperm.xlu0 %1066, %v416
  %v1068 = vpop.permute.xlu0 %1067
  %1069 = vset.pattern.permute.xlu0 6
  %1070 = vperm.xlu0 %1069, %v417
  %v1071 = vpop.permute.xlu0 %1070
  %vm1072 = vcmp.eq.s32.totalorder %v1026, 1
  %vm1073 = vcmp.eq.s32.totalorder %v1029, 1
  %vm1074 = vcmp.eq.s32.totalorder %v1032, 1
  %vm1075 = vcmp.eq.s32.totalorder %v1035, 1
  %vm1076 = vcmp.eq.s32.totalorder %v1038, 1
  %vm1077 = vcmp.eq.s32.totalorder %v1041, 1
  %vm1078 = vcmp.eq.s32.totalorder %v1044, 1
  %vm1079 = vcmp.eq.s32.totalorder %v1047, 1
  %vm1080 = vcmp.eq.s32.totalorder %v1050, 1
  %vm1081 = vcmp.eq.s32.totalorder %v1053, 1
  %vm1082 = vcmp.eq.s32.totalorder %v1056, 1
  %vm1083 = vcmp.eq.s32.totalorder %v1059, 1
  %vm1084 = vcmp.eq.s32.totalorder %v1062, 1
  %vm1085 = vcmp.eq.s32.totalorder %v1065, 1
  %vm1086 = vcmp.eq.s32.totalorder %v1068, 1
  %vm1087 = vcmp.eq.s32.totalorder %v1071, 1
  %v1088 = vsel %vm1072, %v151, -3e+38
  %v1089 = vsel %vm1073, %v152, -3e+38
  %v1090 = vsel %vm1074, %v153, -3e+38
  %v1091 = vsel %vm1075, %v154, -3e+38
  %v1092 = vsel %vm1076, %v155, -3e+38
  %v1093 = vsel %vm1077, %v156, -3e+38
  %v1094 = vsel %vm1078, %v157, -3e+38
  %v1095 = vsel %vm1079, %v158, -3e+38
  %v1096 = vsel %vm1080, %v159, -3e+38
  %v1097 = vsel %vm1081, %v160, -3e+38
  %v1098 = vsel %vm1082, %v161, -3e+38
  %v1099 = vsel %vm1083, %v162, -3e+38
  %v1100 = vsel %vm1084, %v163, -3e+38
  %v1101 = vsel %vm1085, %v164, -3e+38
  %v1102 = vsel %vm1086, %v165, -3e+38
  %v1103 = vsel %vm1087, %v166, -3e+38
  %v1104 = vmax.f32 %v1088, %v1092
  %v1105 = vmax.f32 %v1089, %v1093
  %v1106 = vmax.f32 %v1090, %v1094
  %v1107 = vmax.f32 %v1091, %v1095
  %v1108 = vmax.f32 %v1104, %v1096
  %v1109 = vmax.f32 %v1105, %v1097
  %v1110 = vmax.f32 %v1106, %v1098
  %v1111 = vmax.f32 %v1107, %v1099
  %v1112 = vmax.f32 %v1108, %v1100
  %v1113 = vmax.f32 %v1109, %v1101
  %v1114 = vmax.f32 %v1110, %v1102
  %v1115 = vmax.f32 %v1111, %v1103
  %v1116 = vmax.f32 %v1112, %v1113
  %v1117 = vmax.f32 %v1114, %v1115
  %v1118 = vmax.f32 %v1116, %v1117
  %v1119 = vrot.slane %v1118, 4
  %v1120 = vmax.f32 %v1118, %v1119
  %v1121 = vrot.slane %v1120, 2
  %v1122 = vmax.f32 %v1120, %v1121
  %v1123 = vrot.slane %v1122, 1
  %v1124 = vmax.f32 %v1122, %v1123
  %1125 = vset.pattern.permute.xlu0 7
  %1126 = vperm.xlu0 %1125, %v402
  %v1127 = vpop.permute.xlu0 %1126
  %1128 = vset.pattern.permute.xlu0 7
  %1129 = vperm.xlu0 %1128, %v403
  %v1130 = vpop.permute.xlu0 %1129
  %1131 = vset.pattern.permute.xlu0 7
  %1132 = vperm.xlu0 %1131, %v404
  %v1133 = vpop.permute.xlu0 %1132
  %1134 = vset.pattern.permute.xlu0 7
  %1135 = vperm.xlu0 %1134, %v405
  %v1136 = vpop.permute.xlu0 %1135
  %1137 = vset.pattern.permute.xlu0 7
  %1138 = vperm.xlu0 %1137, %v406
  %v1139 = vpop.permute.xlu0 %1138
  %1140 = vset.pattern.permute.xlu0 7
  %1141 = vperm.xlu0 %1140, %v407
  %v1142 = vpop.permute.xlu0 %1141
  %1143 = vset.pattern.permute.xlu0 7
  %1144 = vperm.xlu0 %1143, %v408
  %v1145 = vpop.permute.xlu0 %1144
  %1146 = vset.pattern.permute.xlu0 7
  %1147 = vperm.xlu0 %1146, %v409
  %v1148 = vpop.permute.xlu0 %1147
  %1149 = vset.pattern.permute.xlu0 7
  %1150 = vperm.xlu0 %1149, %v410
  %v1151 = vpop.permute.xlu0 %1150
  %1152 = vset.pattern.permute.xlu0 7
  %1153 = vperm.xlu0 %1152, %v411
  %v1154 = vpop.permute.xlu0 %1153
  %1155 = vset.pattern.permute.xlu0 7
  %1156 = vperm.xlu0 %1155, %v412
  %v1157 = vpop.permute.xlu0 %1156
  %1158 = vset.pattern.permute.xlu0 7
  %1159 = vperm.xlu0 %1158, %v413
  %v1160 = vpop.permute.xlu0 %1159
  %1161 = vset.pattern.permute.xlu0 7
  %1162 = vperm.xlu0 %1161, %v414
  %v1163 = vpop.permute.xlu0 %1162
  %1164 = vset.pattern.permute.xlu0 7
  %1165 = vperm.xlu0 %1164, %v415
  %v1166 = vpop.permute.xlu0 %1165
  %1167 = vset.pattern.permute.xlu0 7
  %1168 = vperm.xlu0 %1167, %v416
  %v1169 = vpop.permute.xlu0 %1168
  %1170 = vset.pattern.permute.xlu0 7
  %1171 = vperm.xlu0 %1170, %v417
  %v1172 = vpop.permute.xlu0 %1171
  %vm1173 = vcmp.eq.s32.totalorder %v1127, 1
  %vm1174 = vcmp.eq.s32.totalorder %v1130, 1
  %vm1175 = vcmp.eq.s32.totalorder %v1133, 1
  %vm1176 = vcmp.eq.s32.totalorder %v1136, 1
  %vm1177 = vcmp.eq.s32.totalorder %v1139, 1
  %vm1178 = vcmp.eq.s32.totalorder %v1142, 1
  %vm1179 = vcmp.eq.s32.totalorder %v1145, 1
  %vm1180 = vcmp.eq.s32.totalorder %v1148, 1
  %vm1181 = vcmp.eq.s32.totalorder %v1151, 1
  %vm1182 = vcmp.eq.s32.totalorder %v1154, 1
  %vm1183 = vcmp.eq.s32.totalorder %v1157, 1
  %vm1184 = vcmp.eq.s32.totalorder %v1160, 1
  %vm1185 = vcmp.eq.s32.totalorder %v1163, 1
  %vm1186 = vcmp.eq.s32.totalorder %v1166, 1
  %vm1187 = vcmp.eq.s32.totalorder %v1169, 1
  %vm1188 = vcmp.eq.s32.totalorder %v1172, 1
  %v1189 = vsel %vm1173, %v151, -3e+38
  %v1190 = vsel %vm1174, %v152, -3e+38
  %v1191 = vsel %vm1175, %v153, -3e+38
  %v1192 = vsel %vm1176, %v154, -3e+38
  %v1193 = vsel %vm1177, %v155, -3e+38
  %v1194 = vsel %vm1178, %v156, -3e+38
  %v1195 = vsel %vm1179, %v157, -3e+38
  %v1196 = vsel %vm1180, %v158, -3e+38
  %v1197 = vsel %vm1181, %v159, -3e+38
  %v1198 = vsel %vm1182, %v160, -3e+38
  %v1199 = vsel %vm1183, %v161, -3e+38
  %v1200 = vsel %vm1184, %v162, -3e+38
  %v1201 = vsel %vm1185, %v163, -3e+38
  %v1202 = vsel %vm1186, %v164, -3e+38
  %v1203 = vsel %vm1187, %v165, -3e+38
  %v1204 = vsel %vm1188, %v166, -3e+38
  %v1205 = vmax.f32 %v1189, %v1193
  %v1206 = vmax.f32 %v1190, %v1194
  %v1207 = vmax.f32 %v1191, %v1195
  %v1208 = vmax.f32 %v1192, %v1196
  %v1209 = vmax.f32 %v1205, %v1197
  %v1210 = vmax.f32 %v1206, %v1198
  %v1211 = vmax.f32 %v1207, %v1199
  %v1212 = vmax.f32 %v1208, %v1200
  %v1213 = vmax.f32 %v1209, %v1201
  %v1214 = vmax.f32 %v1210, %v1202
  %v1215 = vmax.f32 %v1211, %v1203
  %v1216 = vmax.f32 %v1212, %v1204
  %v1217 = vmax.f32 %v1213, %v1214
  %v1218 = vmax.f32 %v1215, %v1216
  %v1219 = vmax.f32 %v1217, %v1218
  %v1220 = vrot.slane %v1219, 4
  %v1221 = vmax.f32 %v1219, %v1220
  %v1222 = vrot.slane %v1221, 2
  %v1223 = vmax.f32 %v1221, %v1222
  %v1224 = vrot.slane %v1223, 1
  %v1225 = vmax.f32 %v1223, %v1224
  %v1226 = vld [vmem:[#allocation2] sm:$0xff]
  %vm1227 = vcmask 1040384
  %v1228 = vsel %vm1227, %v518, %v619
  %vm1229 = vcmask 1041408
  %v1230 = vsel %vm1229, %v1228, %v720
  %vm1231 = vcmask 1042432
  %v1232 = vsel %vm1231, %v1230, %v821
  %vm1233 = vcmask 1043456
  %v1234 = vsel %vm1233, %v1232, %v922
  %vm1235 = vcmask 1044480
  %v1236 = vsel %vm1235, %v1234, %v1023
  %vm1237 = vcmask 1045504
  %v1238 = vsel %vm1237, %v1236, %v1124
  %vm1239 = vcmask 1046528
  %v1240 = vsel %vm1239, %v1238, %v1225
  %v1241 = vmax.f32 %v1226, %v1240
  %1242 = vst [vmem:[#allocation2] sm:$0xff] %v1241
  // Predicated region
  $region22: #{gcn_pool_block_forward.11} parent=0 // pred_check
    %p1243 = pneg %p17
  $region23: #{gcn_pool_block_forward.11} parent=0 // pred_check_branch
    %1245 = sbr.rel (%p1243) target = $region25
  $region24: #{gcn_pool_block_forward.11} parent=0 // pred_region
    %v1246 = vld [vmem:[%s3] sm:$0xff]
    %v1247 = vld [vmem:[#allocation3] sm:$0xff]
    %v1248 = vmax.f32 %v1246, 1.0
    %1250 = vset.pattern.permute.xlu0 0
    %1251 = vperm.xlu0 %1250, %v1248
    %v1252 = vpop.permute.xlu0 %1251
    %v1254 = vrcp.pop %v1252
    %v1255 = vmul.f32 %v1247, %v1254
    %vm1256 = vcmp.gt.f32.partialorder %v1246, 0.0
    %v1257 = vld [vmem:[#allocation2] sm:$0xff]
    %v1258 = vsel %vm1256, 1, 0
    %1259 = vset.pattern.permute.xlu0 0
    %1260 = vperm.xlu0 %1259, %v1258
    %v1261 = vpop.permute.xlu0 %1260
    %vm1262 = vcmp.eq.s32.totalorder %v1261, 1
    %v1263 = vsel %vm1262, %v1257, 0.0
    %1264 = vst [vmem:[%s4] sm:$0xff] %v1263
    %1265 = vst [vmem:[%s4 + $0x8] sm:$0xff] %v1255
  $region25: #{gcn_pool_block_forward.11} parent=0 // pred_fallthru
    _
  // Predicated region
  $region26: #{gcn_pool_block_forward.11} parent=0 // pred_check
    _
  $region27: #{gcn_pool_block_forward.11} parent=0 // pred_check_branch
    %1267 = sbr.rel (0) target = $region29
  $region28: #{gcn_pool_block_forward.11} parent=0 // pred_region
    _
  $region29: #{gcn_pool_block_forward.11} parent=0 // pred_fallthru
    _
  // Predicated region
  $region30: #{gcn_pool_block_forward.11} parent=0 // pred_check
    _
  $region31: #{gcn_pool_block_forward.11} parent=0 // pred_check_branch
    %1269 = sbr.rel (0) target = $region33
  $region32: #{gcn_pool_block_forward.11} parent=0 // pred_region
    _
  $region33: #{gcn_pool_block_forward.11} parent=0 // pred_fallthru
    _

</llo_original>
